<compile_context>
chip_gen: v7x
topology: tpu7x:2x2x1
jax: 0.10.0
libtpu: 0.0.40
codegen_flags: <defaults>
</compile_context>

<pallas_src>
import math
from functools import partial

import jax
import jax.numpy as jnp
from jax.experimental import pallas as pl
from jax.experimental.pallas import tpu as pltpu

HEADS = 4
LN_EPS = 1e-5          # torch.nn.LayerNorm default eps
OUT_PAD = 128          # lane-dense padded class dimension
NEG_BIG = -1e30


def _layernorm(v, gamma, beta):
    mu = jnp.mean(v, axis=-1, keepdims=True)
    var = jnp.mean((v - mu) ** 2, axis=-1, keepdims=True)
    return (v - mu) * jax.lax.rsqrt(var + LN_EPS) * gamma + beta


# ----------------------------------------------------------------------------
# Fused per-layer kernel (grid axis 0 = layer index)
# ----------------------------------------------------------------------------
def gps_node_kernel(x_ref, a_ref, ahat_ref, scal_ref,
                    inw_ref, inb_ref, outw_ref, outb_ref,
                    wg_ref, bg_ref, wqkvs_ref, bqkvs_ref, wbeta_ref,
                    g1_ref, be1_ref, w1_ref, b1_ref, w2_ref, b2_ref,
                    g2_ref, be2_ref,
                    o_ref, h_sc, attn_sc):
    f32 = jnp.float32
    bf16 = jnp.bfloat16
    l = pl.program_id(0)
    n, c = h_sc.shape
    dh = c // HEADS
    neg = f32(NEG_BIG)

    # ---- input projection: first grid step only ----
    @pl.when(l == 0)
    def _():
        h_sc[...] = (jnp.dot(x_ref[...].astype(bf16), inw_ref[...],
                             preferred_element_type=f32) + inb_ref[...])

    h = h_sc[...]
    hb = h.astype(bf16)

    # ---- local model: GCNConv(dim_h, dim_h, add_self_loops=False) ----
    xw = jnp.dot(hb, wg_ref[...], preferred_element_type=f32)
    local = (jnp.dot(ahat_ref[...], xw.astype(bf16), preferred_element_type=f32)
             + bg_ref[...])

    # ---- global model: TransformerConv(heads=4, concat=True, beta=True) ----
    # One fused lane-dense projection: [N, 4C] = hb @ [Wq/sqrt(dh) | Wk | Wv | Wskip]
    qkvs = (jnp.dot(hb, wqkvs_ref[...], preferred_element_type=f32)
            + bqkvs_ref[...])

    a = a_ref[...]            # [N, N] edge multiplicities (A[i, j] = #edges j->i)
    edge = a > 0.0            # recomputed at point of use; nothing persistent

    # Per-head attention from lane slices of the fused projection; head outputs
    # are written directly into lane slices of attn_sc (no per-head concat).
    for hd in range(HEADS):
        lo = hd * dh
        qh = qkvs[:, lo:lo + dh].astype(bf16)             # already scaled host-side
        kh = qkvs[:, c + lo:c + lo + dh].astype(bf16)
        vh = qkvs[:, 2 * c + lo:2 * c + lo + dh].astype(bf16)
        s = jax.lax.dot_general(qh, kh, (((1,), (1,)), ((), ())),
                                preferred_element_type=f32)          # [N, N]
        s = jnp.where(edge, s, neg)
        m = jnp.max(s, axis=-1, keepdims=True)
        p = a * jnp.exp(s - m)                            # edge-multiplicity weighting
        den = jnp.sum(p, axis=-1, keepdims=True)
        inv = jnp.where(den > 0.0, pl.reciprocal(den, approx=True), 0.0)
        alpha = (p * inv).astype(bf16)                    # isolated nodes -> zero row
        attn_sc[:, lo:lo + dh] = jnp.dot(alpha, vh, preferred_element_type=f32)

    attn = attn_sc[...]
    xr = qkvs[:, 3 * c:4 * c]
    # beta = sigmoid(lin_beta([attn, xr, attn - xr])); weights pre-combined
    # host-side to two rows: (w0 + w2)·attn + (w1 - w2)·xr
    wb = wbeta_ref[...]                                   # [2, C]
    beta = jax.nn.sigmoid(jnp.sum(attn * wb[0:1, :] + xr * wb[1:2, :],
                                  axis=-1, keepdims=True))
    glob = beta * xr + (1.0 - beta) * attn

    # ---- GPS combination, norms, FFN ----
    y = scal_ref[l, 0] * local + scal_ref[l, 1] * glob
    # reference computes norm1(x + x); LayerNorm(2y) == LayerNorm(y), add dropped.
    y2 = _layernorm(y, g1_ref[...], be1_ref[...])
    h1 = jnp.maximum(
        jnp.dot(y2.astype(bf16), w1_ref[...], preferred_element_type=f32)
        + b1_ref[...], 0.0)
    ff = (jnp.dot(h1.astype(bf16), w2_ref[...], preferred_element_type=f32)
          + b2_ref[...])
    h_new = _layernorm(ff + y2, g2_ref[...], be2_ref[...])
    # TODO(synk): nn.Dropout(0.1) -> eval-mode identity.
    h_sc[...] = h_new

    # ---- output projection + log_softmax: last grid step only ----
    @pl.when(l == pl.num_programs(0) - 1)
    def _():
        logits = (jnp.dot(h_new.astype(bf16), outw_ref[...],
                          preferred_element_type=f32) + outb_ref[...])
        mx = jnp.max(logits, axis=-1, keepdims=True)
        lse = jnp.log(jnp.sum(jnp.exp(logits - mx), axis=-1, keepdims=True)) + mx
        o_ref[...] = logits - lse


# ----------------------------------------------------------------------------
# Host-side graph densification (plain JAX)
# ----------------------------------------------------------------------------
def build_dense_graph(edge_index, n):
    src = edge_index[0].astype(jnp.int32)
    dst = edge_index[1].astype(jnp.int32)
    # A[i, j] = number of edges j -> i (duplicates accumulate, like PyG messages)
    a = jnp.zeros((n, n), jnp.float32).at[dst, src].add(1.0)
    deg = jnp.sum(a, axis=1, keepdims=True)                     # in-degree (gcn_norm)
    dinv = jnp.where(deg > 0, jax.lax.rsqrt(deg), 0.0)          # [N, 1]
    ahat = (dinv * a * dinv.reshape(1, n)).astype(jnp.bfloat16)  # D^-1/2 A D^-1/2
    return a, ahat


# ----------------------------------------------------------------------------
# Deterministic parameter initialization (stacked [L, ...] layout, host folds)
# ----------------------------------------------------------------------------
def init_params(in_ch, hidden, out_ch, num_layers):
    keys = iter(jax.random.split(jax.random.PRNGKey(0), 64))
    dh = hidden // HEADS
    L = num_layers
    q_scale = 1.0 / math.sqrt(dh)

    def w(shape, scale=0.1):
        return scale * jax.random.normal(next(keys), shape, jnp.float32)

    def bf(t):
        return t.astype(jnp.bfloat16)

    # Per-head weights laid out head-major along the output lanes; fused as
    # [Wq*1/sqrt(dh) | Wk | Wv | Wskip]  (attention scale folded into Q block).
    wq, wk, wv, wsk = (w((L, hidden, hidden)) for _ in range(4))
    bq, bk, bv, bsk = (w((L, 1, hidden)) for _ in range(4))
    wqkvs = bf(jnp.concatenate([wq * q_scale, wk, wv, wsk], axis=-1))   # [L, C, 4C]
    bqkvs = jnp.concatenate([bq * q_scale, bk, bv, bsk], axis=-1)       # [L, 1, 4C]

    # lin_beta rows (attn, x_r, attn - x_r) pre-combined to 2 rows.
    wb3 = w((L, 3, hidden))
    wbeta = jnp.stack([wb3[:, 0] + wb3[:, 2], wb3[:, 1] - wb3[:, 2]], axis=1)

    # Output projection padded to 128 lanes (zeros weights, -1e30 bias on pads).
    ow = w((hidden, out_ch))
    ob = w((1, out_ch))
    out_w = jnp.zeros((hidden, OUT_PAD), jnp.float32).at[:, :out_ch].set(ow)
    out_b = jnp.full((1, OUT_PAD), NEG_BIG, jnp.float32).at[:, :out_ch].set(ob)

    return {
        "scal": jnp.ones((L, 2), jnp.float32),     # [local_weight, global_weight]
        "in_w": bf(w((in_ch, hidden))), "in_b": w((1, hidden)),
        "out_w": bf(out_w), "out_b": out_b,
        "wg": bf(w((L, hidden, hidden))), "bg": w((L, 1, hidden)),
        "wqkvs": wqkvs, "bqkvs": bqkvs, "wbeta": wbeta,
        "g1": jnp.ones((L, 1, hidden), jnp.float32),
        "be1": jnp.zeros((L, 1, hidden), jnp.float32),
        "w1": bf(w((L, hidden, 2 * hidden))), "bf1": w((L, 1, 2 * hidden)),
        "w2": bf(w((L, 2 * hidden, hidden))), "bf2": w((L, 1, hidden)),
        "g2": jnp.ones((L, 1, hidden), jnp.float32),
        "be2": jnp.zeros((L, 1, hidden), jnp.float32),
    }


_GLOBAL_PARAMS = ("in_w", "in_b", "out_w", "out_b")
_LAYER_PARAMS = ("wg", "bg", "wqkvs", "bqkvs", "wbeta",
                 "g1", "be1", "w1", "bf1", "w2", "bf2", "g2", "be2")


# ----------------------------------------------------------------------------
# Full forward: one fused pallas_call with a layer grid axis
# ----------------------------------------------------------------------------
@partial(jax.jit, static_argnames=("out_ch",))
def gps_node_forward(params, x, edge_index, *, out_ch):
    n = x.shape[0]
    hidden = params["in_w"].shape[1]
    num_layers = params["wg"].shape[0]

    a, ahat = build_dense_graph(edge_index, n)
    x32 = x.astype(jnp.float32)

    args = ((x32, a, ahat, params["scal"])
            + tuple(params[k] for k in _GLOBAL_PARAMS)
            + tuple(params[k] for k in _LAYER_PARAMS))

    def whole(arr):
        nd = arr.ndim
        return pl.BlockSpec(arr.shape, lambda l, _nd=nd: (0,) * _nd)

    def per_layer(arr):                       # stacked [L, r, c] -> streamed (r, c)
        return pl.BlockSpec((None,) + arr.shape[1:], lambda l: (l, 0, 0))

    in_specs = ([whole(x32), whole(a), whole(ahat),
                 pl.BlockSpec(memory_space=pltpu.MemorySpace.SMEM)]
                + [whole(params[k]) for k in _GLOBAL_PARAMS]
                + [per_layer(params[k]) for k in _LAYER_PARAMS])

    grid_spec = pltpu.PrefetchScalarGridSpec(
        num_scalar_prefetch=0,
        grid=(num_layers,),
        in_specs=in_specs,
        out_specs=pl.BlockSpec((n, OUT_PAD), lambda l: (0, 0)),
        scratch_shapes=[
            pltpu.VMEM((n, hidden), jnp.float32),   # h: persists across layer steps
            pltpu.VMEM((n, hidden), jnp.float32),   # per-head attention assembly
        ],
    )

    out_pad = pl.pallas_call(
        gps_node_kernel,
        out_shape=jax.ShapeDtypeStruct((n, OUT_PAD), jnp.float32),
        grid_spec=grid_spec,
        compiler_params=pltpu.CompilerParams(
            dimension_semantics=("arbitrary",),          # layer axis is sequential
            vmem_limit_bytes=32 * 1024 * 1024,           # size from footprint if scaled up
        ),
    )(*args)
    return out_pad[:, :out_ch]


if __name__ == "__main__":
    N, IN_CH, HIDDEN, OUT_CH, NUM_LAYERS = 16, 8, 64, 4, 2

    key = jax.random.PRNGKey(0)
    x = jax.random.normal(key, (N, IN_CH), jnp.float32)

    # deterministic bidirectional ring graph: i <-> (i+1) % N
    src = jnp.arange(N, dtype=jnp.int32)
    dst = (src + 1) % N
    edge_index = jnp.stack(
        [jnp.concatenate([src, dst]), jnp.concatenate([dst, src])], axis=0
    )  # [2, 2N]

    params = init_params(IN_CH, HIDDEN, OUT_CH, NUM_LAYERS)
    out = gps_node_forward(params, x, edge_index, out_ch=OUT_CH)
    jax.block_until_ready(out)

    assert out.shape == (N, OUT_CH)
    assert bool(jnp.all(jnp.isfinite(out)))
    # rows of log_softmax must sum (in prob space) to 1
    assert bool(jnp.allclose(jnp.sum(jnp.exp(out), axis=1), 1.0, atol=1e-4))
    print("KERNEL_OK")
</pallas_src>

<mosaic_0001>
module attributes {stable_mosaic.version = 11 : i64} {
  func.func private @main(%arg0: i32) attributes {dimension_semantics = [#tpu.dimension_semantics<core_parallel>], iteration_bounds = array<i64: 2>, tpu.core_type = #tpu.core_type<sc_scalar_subcore>, window_params = []} {
    return
  }
}

module attributes {stable_mosaic.version = 11 : i64} {
  func.func private @main(%arg0: i32) attributes {dimension_semantics = [#tpu.dimension_semantics<core_parallel>], iteration_bounds = array<i64: 2>, tpu.core_type = #tpu.core_type<sc_scalar_subcore>, window_params = []} {
    return
  }
}

module attributes {stable_mosaic.version = 11 : i64} {
  func.func @gps_node_kernel(%arg0: i32, %arg1: memref<16x8xf32, #tpu.memory_space<vmem>>, %arg2: memref<16x16xf32, #tpu.memory_space<vmem>>, %arg3: memref<16x16xbf16, #tpu.memory_space<vmem>>, %arg4: memref<2x2xf32, #tpu.memory_space<smem>>, %arg5: memref<8x64xbf16, #tpu.memory_space<vmem>>, %arg6: memref<1x64xf32, #tpu.memory_space<vmem>>, %arg7: memref<64x128xbf16, #tpu.memory_space<vmem>>, %arg8: memref<1x128xf32, #tpu.memory_space<vmem>>, %arg9: memref<1x64x64xbf16, #tpu.memory_space<vmem>>, %arg10: memref<1x1x64xf32, #tpu.memory_space<vmem>>, %arg11: memref<1x64x256xbf16, #tpu.memory_space<vmem>>, %arg12: memref<1x1x256xf32, #tpu.memory_space<vmem>>, %arg13: memref<1x2x64xf32, #tpu.memory_space<vmem>>, %arg14: memref<1x1x64xf32, #tpu.memory_space<vmem>>, %arg15: memref<1x1x64xf32, #tpu.memory_space<vmem>>, %arg16: memref<1x64x128xbf16, #tpu.memory_space<vmem>>, %arg17: memref<1x1x128xf32, #tpu.memory_space<vmem>>, %arg18: memref<1x128x64xbf16, #tpu.memory_space<vmem>>, %arg19: memref<1x1x64xf32, #tpu.memory_space<vmem>>, %arg20: memref<1x1x64xf32, #tpu.memory_space<vmem>>, %arg21: memref<1x1x64xf32, #tpu.memory_space<vmem>>, %arg22: memref<16x128xf32, #tpu.memory_space<vmem>>, %arg23: memref<16x64xf32, #tpu.memory_space<vmem>>, %arg24: memref<16x64xf32, #tpu.memory_space<vmem>>) attributes {dimension_semantics = [#tpu.dimension_semantics<arbitrary>], iteration_bounds = array<i64: 2>, scalar_prefetch = 0 : i64, scratch_operands = 2 : i64, tpu.core_type = #tpu.core_type<tc>, window_params = [{pipeline_mode = #tpu.pipeline_mode<synchronous>, transform_indices = @transform_0, window_bounds = array<i64: 16, 8>}, {pipeline_mode = #tpu.pipeline_mode<synchronous>, transform_indices = @transform_1, window_bounds = array<i64: 16, 16>}, {pipeline_mode = #tpu.pipeline_mode<synchronous>, transform_indices = @transform_2, window_bounds = array<i64: 16, 16>}, {transform_indices = @transform_3, window_bounds = array<i64: 2, 2>}, {pipeline_mode = #tpu.pipeline_mode<synchronous>, transform_indices = @transform_4, window_bounds = array<i64: 8, 64>}, {pipeline_mode = #tpu.pipeline_mode<synchronous>, transform_indices = @transform_5, window_bounds = array<i64: 1, 64>}, {pipeline_mode = #tpu.pipeline_mode<synchronous>, transform_indices = @transform_6, window_bounds = array<i64: 64, 128>}, {pipeline_mode = #tpu.pipeline_mode<synchronous>, transform_indices = @transform_7, window_bounds = array<i64: 1, 128>}, {transform_indices = @transform_8, window_bounds = array<i64: 1, 64, 64>}, {transform_indices = @transform_9, window_bounds = array<i64: 1, 1, 64>}, {transform_indices = @transform_10, window_bounds = array<i64: 1, 64, 256>}, {transform_indices = @transform_11, window_bounds = array<i64: 1, 1, 256>}, {transform_indices = @transform_12, window_bounds = array<i64: 1, 2, 64>}, {transform_indices = @transform_13, window_bounds = array<i64: 1, 1, 64>}, {transform_indices = @transform_14, window_bounds = array<i64: 1, 1, 64>}, {transform_indices = @transform_15, window_bounds = array<i64: 1, 64, 128>}, {transform_indices = @transform_16, window_bounds = array<i64: 1, 1, 128>}, {transform_indices = @transform_17, window_bounds = array<i64: 1, 128, 64>}, {transform_indices = @transform_18, window_bounds = array<i64: 1, 1, 64>}, {transform_indices = @transform_19, window_bounds = array<i64: 1, 1, 64>}, {transform_indices = @transform_20, window_bounds = array<i64: 1, 1, 64>}, {pipeline_mode = #tpu.pipeline_mode<synchronous>, transform_indices = @transform_21, window_bounds = array<i64: 16, 128>}]} {
    %c0_i32 = arith.constant 0 : i32
    %0 = arith.cmpi eq, %arg0, %c0_i32 : i32
    %1 = arith.extui %0 : i1 to i32
    %c0_i32_0 = arith.constant 0 : i32
    %2 = arith.cmpi ne, %1, %c0_i32_0 : i32
    scf.if %2 {
      %c0_103 = arith.constant 0 : index
      %c0_104 = arith.constant 0 : index
      %242 = vector.load %arg1[%c0_103, %c0_104] : memref<16x8xf32, #tpu.memory_space<vmem>>, vector<16x8xf32>
      %243 = arith.truncf %242 : vector<16x8xf32> to vector<16x8xbf16>
      %c0_105 = arith.constant 0 : index
      %c0_106 = arith.constant 0 : index
      %244 = vector.load %arg5[%c0_105, %c0_106] : memref<8x64xbf16, #tpu.memory_space<vmem>>, vector<8x64xbf16>
      %cst_107 = arith.constant dense<0.000000e+00> : vector<16x64xf32>
      %245 = tpu.matmul %243, %244, %cst_107 {dimension_numbers = #tpu.dot_dimension_numbers<[1], [0], [0], [1], [0, 0, 1, 1], [], []>} : vector<16x8xbf16>, vector<8x64xbf16>, vector<16x64xf32> -> vector<16x64xf32>
      %c0_108 = arith.constant 0 : index
      %c0_109 = arith.constant 0 : index
      %246 = vector.load %arg6[%c0_108, %c0_109] : memref<1x64xf32, #tpu.memory_space<vmem>>, vector<1x64xf32>
      %247 = vector.broadcast %246 : vector<1x64xf32> to vector<16x64xf32>
      %248 = arith.addf %245, %247 : vector<16x64xf32>
      %c0_110 = arith.constant 0 : index
      %c0_111 = arith.constant 0 : index
      %249 = vector.load %arg23[%c0_110, %c0_111] : memref<16x64xf32, #tpu.memory_space<vmem>>, vector<16x64xf32>
      tpu.vector_store %arg23[%c0_110, %c0_111], %248 {strides = array<i32>} : memref<16x64xf32, #tpu.memory_space<vmem>>, vector<16x64xf32>,
    } else {
    }
    %c0 = arith.constant 0 : index
    %c0_1 = arith.constant 0 : index
    %3 = vector.load %arg23[%c0, %c0_1] : memref<16x64xf32, #tpu.memory_space<vmem>>, vector<16x64xf32>
    %4 = arith.truncf %3 : vector<16x64xf32> to vector<16x64xbf16>
    %c0_2 = arith.constant 0 : index
    %c0_3 = arith.constant 0 : index
    %c0_4 = arith.constant 0 : index
    %5 = vector.load %arg9[%c0_2, %c0_3, %c0_4] : memref<1x64x64xbf16, #tpu.memory_space<vmem>>, vector<1x64x64xbf16>
    %6 = vector.shape_cast %5 : vector<1x64x64xbf16> to vector<64x64xbf16>
    %cst = arith.constant dense<0.000000e+00> : vector<16x64xf32>
    %7 = tpu.matmul %4, %6, %cst {dimension_numbers = #tpu.dot_dimension_numbers<[1], [0], [0], [1], [0, 0, 1, 1], [], []>} : vector<16x64xbf16>, vector<64x64xbf16>, vector<16x64xf32> -> vector<16x64xf32>
    %c0_5 = arith.constant 0 : index
    %c0_6 = arith.constant 0 : index
    %8 = vector.load %arg3[%c0_5, %c0_6] : memref<16x16xbf16, #tpu.memory_space<vmem>>, vector<16x16xbf16>
    %9 = arith.truncf %7 : vector<16x64xf32> to vector<16x64xbf16>
    %cst_7 = arith.constant dense<0.000000e+00> : vector<16x64xf32>
    %10 = tpu.matmul %8, %9, %cst_7 {dimension_numbers = #tpu.dot_dimension_numbers<[1], [0], [0], [1], [0, 0, 1, 1], [], []>} : vector<16x16xbf16>, vector<16x64xbf16>, vector<16x64xf32> -> vector<16x64xf32>
    %c0_8 = arith.constant 0 : index
    %c0_9 = arith.constant 0 : index
    %c0_10 = arith.constant 0 : index
    %11 = vector.load %arg10[%c0_8, %c0_9, %c0_10] : memref<1x1x64xf32, #tpu.memory_space<vmem>>, vector<1x1x64xf32>
    %12 = vector.shape_cast %11 : vector<1x1x64xf32> to vector<1x64xf32>
    %13 = vector.broadcast %12 : vector<1x64xf32> to vector<16x64xf32>
    %14 = arith.addf %10, %13 : vector<16x64xf32>
    %c0_11 = arith.constant 0 : index
    %c0_12 = arith.constant 0 : index
    %c0_13 = arith.constant 0 : index
    %15 = vector.load %arg11[%c0_11, %c0_12, %c0_13] : memref<1x64x256xbf16, #tpu.memory_space<vmem>>, vector<1x64x256xbf16>
    %16 = vector.shape_cast %15 : vector<1x64x256xbf16> to vector<64x256xbf16>
    %cst_14 = arith.constant dense<0.000000e+00> : vector<16x256xf32>
    %17 = tpu.matmul %4, %16, %cst_14 {dimension_numbers = #tpu.dot_dimension_numbers<[1], [0], [0], [1], [0, 0, 1, 1], [], []>} : vector<16x64xbf16>, vector<64x256xbf16>, vector<16x256xf32> -> vector<16x256xf32>
    %c0_15 = arith.constant 0 : index
    %c0_16 = arith.constant 0 : index
    %c0_17 = arith.constant 0 : index
    %18 = vector.load %arg12[%c0_15, %c0_16, %c0_17] : memref<1x1x256xf32, #tpu.memory_space<vmem>>, vector<1x1x256xf32>
    %19 = vector.shape_cast %18 : vector<1x1x256xf32> to vector<1x256xf32>
    %20 = vector.broadcast %19 : vector<1x256xf32> to vector<16x256xf32>
    %21 = arith.addf %17, %20 : vector<16x256xf32>
    %c0_18 = arith.constant 0 : index
    %c0_19 = arith.constant 0 : index
    %22 = vector.load %arg2[%c0_18, %c0_19] : memref<16x16xf32, #tpu.memory_space<vmem>>, vector<16x16xf32>
    %cst_20 = arith.constant 0.000000e+00 : f32
    %23 = vector.broadcast %cst_20 : f32 to vector<16x16xf32>
    %24 = arith.cmpf ogt, %22, %23 : vector<16x16xf32>
    %25 = vector.extract_strided_slice %21 {offsets = [0, 0], sizes = [16, 16], strides = [1, 1]} : vector<16x256xf32> to vector<16x16xf32>
    %26 = arith.truncf %25 : vector<16x16xf32> to vector<16x16xbf16>
    %27 = vector.extract_strided_slice %21 {offsets = [0, 64], sizes = [16, 16], strides = [1, 1]} : vector<16x256xf32> to vector<16x16xf32>
    %28 = arith.truncf %27 : vector<16x16xf32> to vector<16x16xbf16>
    %29 = vector.extract_strided_slice %21 {offsets = [0, 128], sizes = [16, 16], strides = [1, 1]} : vector<16x256xf32> to vector<16x16xf32>
    %30 = arith.truncf %29 : vector<16x16xf32> to vector<16x16xbf16>
    %cst_21 = arith.constant dense<0.000000e+00> : vector<16x16xf32>
    %31 = tpu.matmul %26, %28, %cst_21 {dimension_numbers = #tpu.dot_dimension_numbers<[1], [1], [0], [0], [0, 0, 1, 0], [], []>} : vector<16x16xbf16>, vector<16x16xbf16>, vector<16x16xf32> -> vector<16x16xf32>
    %cst_22 = arith.constant -1.000000e+30 : f32
    %32 = vector.broadcast %cst_22 : f32 to vector<16x16xf32>
    %33 = arith.select %24, %31, %32 : vector<16x16xi1>, vector<16x16xf32>
    %cst_23 = arith.constant dense<0xFF800000> : vector<16xf32>
    %34 = vector.multi_reduction <maximumf>, %33, %cst_23 [1] : vector<16x16xf32> to vector<16xf32>
    %35 = vector.shape_cast %34 : vector<16xf32> to vector<16x1xf32>
    %36 = vector.broadcast %35 : vector<16x1xf32> to vector<16x16xf32>
    %37 = arith.subf %33, %36 : vector<16x16xf32>
    %38 = math.exp %37 : vector<16x16xf32>
    %39 = arith.mulf %22, %38 : vector<16x16xf32>
    %cst_24 = arith.constant dense<0.000000e+00> : vector<16xf32>
    %40 = vector.multi_reduction <add>, %39, %cst_24 [1] : vector<16x16xf32> to vector<16xf32>
    %41 = vector.shape_cast %40 : vector<16xf32> to vector<16x1xf32>
    %cst_25 = arith.constant 0.000000e+00 : f32
    %42 = vector.broadcast %cst_25 : f32 to vector<16x1xf32>
    %43 = arith.cmpf ogt, %41, %42 : vector<16x1xf32>
    %44 = tpu.reciprocal %41 {approx = true} : vector<16x1xf32> -> vector<16x1xf32>
    %cst_26 = arith.constant 0.000000e+00 : f32
    %45 = vector.broadcast %cst_26 : f32 to vector<16x1xf32>
    %46 = arith.select %43, %44, %45 : vector<16x1xi1>, vector<16x1xf32>
    %47 = vector.broadcast %46 : vector<16x1xf32> to vector<16x16xf32>
    %48 = arith.mulf %39, %47 : vector<16x16xf32>
    %49 = arith.truncf %48 : vector<16x16xf32> to vector<16x16xbf16>
    %cst_27 = arith.constant dense<0.000000e+00> : vector<16x16xf32>
    %50 = tpu.matmul %49, %30, %cst_27 {dimension_numbers = #tpu.dot_dimension_numbers<[1], [0], [0], [1], [0, 0, 1, 1], [], []>} : vector<16x16xbf16>, vector<16x16xbf16>, vector<16x16xf32> -> vector<16x16xf32>
    %c0_28 = arith.constant 0 : index
    %c0_29 = arith.constant 0 : index
    %51 = vector.load %arg24[%c0_28, %c0_29] : memref<16x64xf32, #tpu.memory_space<vmem>>, vector<16x16xf32>
    tpu.vector_store %arg24[%c0_28, %c0_29], %50 {strides = array<i32>} : memref<16x64xf32, #tpu.memory_space<vmem>>, vector<16x16xf32>,
    %52 = vector.extract_strided_slice %21 {offsets = [0, 16], sizes = [16, 16], strides = [1, 1]} : vector<16x256xf32> to vector<16x16xf32>
    %53 = arith.truncf %52 : vector<16x16xf32> to vector<16x16xbf16>
    %54 = vector.extract_strided_slice %21 {offsets = [0, 80], sizes = [16, 16], strides = [1, 1]} : vector<16x256xf32> to vector<16x16xf32>
    %55 = arith.truncf %54 : vector<16x16xf32> to vector<16x16xbf16>
    %56 = vector.extract_strided_slice %21 {offsets = [0, 144], sizes = [16, 16], strides = [1, 1]} : vector<16x256xf32> to vector<16x16xf32>
    %57 = arith.truncf %56 : vector<16x16xf32> to vector<16x16xbf16>
    %cst_30 = arith.constant dense<0.000000e+00> : vector<16x16xf32>
    %58 = tpu.matmul %53, %55, %cst_30 {dimension_numbers = #tpu.dot_dimension_numbers<[1], [1], [0], [0], [0, 0, 1, 0], [], []>} : vector<16x16xbf16>, vector<16x16xbf16>, vector<16x16xf32> -> vector<16x16xf32>
    %cst_31 = arith.constant -1.000000e+30 : f32
    %59 = vector.broadcast %cst_31 : f32 to vector<16x16xf32>
    %60 = arith.select %24, %58, %59 : vector<16x16xi1>, vector<16x16xf32>
    %cst_32 = arith.constant dense<0xFF800000> : vector<16xf32>
    %61 = vector.multi_reduction <maximumf>, %60, %cst_32 [1] : vector<16x16xf32> to vector<16xf32>
    %62 = vector.shape_cast %61 : vector<16xf32> to vector<16x1xf32>
    %63 = vector.broadcast %62 : vector<16x1xf32> to vector<16x16xf32>
    %64 = arith.subf %60, %63 : vector<16x16xf32>
    %65 = math.exp %64 : vector<16x16xf32>
    %66 = arith.mulf %22, %65 : vector<16x16xf32>
    %cst_33 = arith.constant dense<0.000000e+00> : vector<16xf32>
    %67 = vector.multi_reduction <add>, %66, %cst_33 [1] : vector<16x16xf32> to vector<16xf32>
    %68 = vector.shape_cast %67 : vector<16xf32> to vector<16x1xf32>
    %cst_34 = arith.constant 0.000000e+00 : f32
    %69 = vector.broadcast %cst_34 : f32 to vector<16x1xf32>
    %70 = arith.cmpf ogt, %68, %69 : vector<16x1xf32>
    %71 = tpu.reciprocal %68 {approx = true} : vector<16x1xf32> -> vector<16x1xf32>
    %cst_35 = arith.constant 0.000000e+00 : f32
    %72 = vector.broadcast %cst_35 : f32 to vector<16x1xf32>
    %73 = arith.select %70, %71, %72 : vector<16x1xi1>, vector<16x1xf32>
    %74 = vector.broadcast %73 : vector<16x1xf32> to vector<16x16xf32>
    %75 = arith.mulf %66, %74 : vector<16x16xf32>
    %76 = arith.truncf %75 : vector<16x16xf32> to vector<16x16xbf16>
    %cst_36 = arith.constant dense<0.000000e+00> : vector<16x16xf32>
    %77 = tpu.matmul %76, %57, %cst_36 {dimension_numbers = #tpu.dot_dimension_numbers<[1], [0], [0], [1], [0, 0, 1, 1], [], []>} : vector<16x16xbf16>, vector<16x16xbf16>, vector<16x16xf32> -> vector<16x16xf32>
    %c0_37 = arith.constant 0 : index
    %c16 = arith.constant 16 : index
    %78 = vector.load %arg24[%c0_37, %c16] : memref<16x64xf32, #tpu.memory_space<vmem>>, vector<16x16xf32>
    tpu.vector_store %arg24[%c0_37, %c16], %77 {strides = array<i32>} : memref<16x64xf32, #tpu.memory_space<vmem>>, vector<16x16xf32>,
    %79 = vector.extract_strided_slice %21 {offsets = [0, 32], sizes = [16, 16], strides = [1, 1]} : vector<16x256xf32> to vector<16x16xf32>
    %80 = arith.truncf %79 : vector<16x16xf32> to vector<16x16xbf16>
    %81 = vector.extract_strided_slice %21 {offsets = [0, 96], sizes = [16, 16], strides = [1, 1]} : vector<16x256xf32> to vector<16x16xf32>
    %82 = arith.truncf %81 : vector<16x16xf32> to vector<16x16xbf16>
    %83 = vector.extract_strided_slice %21 {offsets = [0, 160], sizes = [16, 16], strides = [1, 1]} : vector<16x256xf32> to vector<16x16xf32>
    %84 = arith.truncf %83 : vector<16x16xf32> to vector<16x16xbf16>
    %cst_38 = arith.constant dense<0.000000e+00> : vector<16x16xf32>
    %85 = tpu.matmul %80, %82, %cst_38 {dimension_numbers = #tpu.dot_dimension_numbers<[1], [1], [0], [0], [0, 0, 1, 0], [], []>} : vector<16x16xbf16>, vector<16x16xbf16>, vector<16x16xf32> -> vector<16x16xf32>
    %cst_39 = arith.constant -1.000000e+30 : f32
    %86 = vector.broadcast %cst_39 : f32 to vector<16x16xf32>
    %87 = arith.select %24, %85, %86 : vector<16x16xi1>, vector<16x16xf32>
    %cst_40 = arith.constant dense<0xFF800000> : vector<16xf32>
    %88 = vector.multi_reduction <maximumf>, %87, %cst_40 [1] : vector<16x16xf32> to vector<16xf32>
    %89 = vector.shape_cast %88 : vector<16xf32> to vector<16x1xf32>
    %90 = vector.broadcast %89 : vector<16x1xf32> to vector<16x16xf32>
    %91 = arith.subf %87, %90 : vector<16x16xf32>
    %92 = math.exp %91 : vector<16x16xf32>
    %93 = arith.mulf %22, %92 : vector<16x16xf32>
    %cst_41 = arith.constant dense<0.000000e+00> : vector<16xf32>
    %94 = vector.multi_reduction <add>, %93, %cst_41 [1] : vector<16x16xf32> to vector<16xf32>
    %95 = vector.shape_cast %94 : vector<16xf32> to vector<16x1xf32>
    %cst_42 = arith.constant 0.000000e+00 : f32
    %96 = vector.broadcast %cst_42 : f32 to vector<16x1xf32>
    %97 = arith.cmpf ogt, %95, %96 : vector<16x1xf32>
    %98 = tpu.reciprocal %95 {approx = true} : vector<16x1xf32> -> vector<16x1xf32>
    %cst_43 = arith.constant 0.000000e+00 : f32
    %99 = vector.broadcast %cst_43 : f32 to vector<16x1xf32>
    %100 = arith.select %97, %98, %99 : vector<16x1xi1>, vector<16x1xf32>
    %101 = vector.broadcast %100 : vector<16x1xf32> to vector<16x16xf32>
    %102 = arith.mulf %93, %101 : vector<16x16xf32>
    %103 = arith.truncf %102 : vector<16x16xf32> to vector<16x16xbf16>
    %cst_44 = arith.constant dense<0.000000e+00> : vector<16x16xf32>
    %104 = tpu.matmul %103, %84, %cst_44 {dimension_numbers = #tpu.dot_dimension_numbers<[1], [0], [0], [1], [0, 0, 1, 1], [], []>} : vector<16x16xbf16>, vector<16x16xbf16>, vector<16x16xf32> -> vector<16x16xf32>
    %c0_45 = arith.constant 0 : index
    %c32 = arith.constant 32 : index
    %105 = vector.load %arg24[%c0_45, %c32] : memref<16x64xf32, #tpu.memory_space<vmem>>, vector<16x16xf32>
    tpu.vector_store %arg24[%c0_45, %c32], %104 {strides = array<i32>} : memref<16x64xf32, #tpu.memory_space<vmem>>, vector<16x16xf32>,
    %106 = vector.extract_strided_slice %21 {offsets = [0, 48], sizes = [16, 16], strides = [1, 1]} : vector<16x256xf32> to vector<16x16xf32>
    %107 = arith.truncf %106 : vector<16x16xf32> to vector<16x16xbf16>
    %108 = vector.extract_strided_slice %21 {offsets = [0, 112], sizes = [16, 16], strides = [1, 1]} : vector<16x256xf32> to vector<16x16xf32>
    %109 = arith.truncf %108 : vector<16x16xf32> to vector<16x16xbf16>
    %110 = vector.extract_strided_slice %21 {offsets = [0, 176], sizes = [16, 16], strides = [1, 1]} : vector<16x256xf32> to vector<16x16xf32>
    %111 = arith.truncf %110 : vector<16x16xf32> to vector<16x16xbf16>
    %cst_46 = arith.constant dense<0.000000e+00> : vector<16x16xf32>
    %112 = tpu.matmul %107, %109, %cst_46 {dimension_numbers = #tpu.dot_dimension_numbers<[1], [1], [0], [0], [0, 0, 1, 0], [], []>} : vector<16x16xbf16>, vector<16x16xbf16>, vector<16x16xf32> -> vector<16x16xf32>
    %cst_47 = arith.constant -1.000000e+30 : f32
    %113 = vector.broadcast %cst_47 : f32 to vector<16x16xf32>
    %114 = arith.select %24, %112, %113 : vector<16x16xi1>, vector<16x16xf32>
    %cst_48 = arith.constant dense<0xFF800000> : vector<16xf32>
    %115 = vector.multi_reduction <maximumf>, %114, %cst_48 [1] : vector<16x16xf32> to vector<16xf32>
    %116 = vector.shape_cast %115 : vector<16xf32> to vector<16x1xf32>
    %117 = vector.broadcast %116 : vector<16x1xf32> to vector<16x16xf32>
    %118 = arith.subf %114, %117 : vector<16x16xf32>
    %119 = math.exp %118 : vector<16x16xf32>
    %120 = arith.mulf %22, %119 : vector<16x16xf32>
    %cst_49 = arith.constant dense<0.000000e+00> : vector<16xf32>
    %121 = vector.multi_reduction <add>, %120, %cst_49 [1] : vector<16x16xf32> to vector<16xf32>
    %122 = vector.shape_cast %121 : vector<16xf32> to vector<16x1xf32>
    %cst_50 = arith.constant 0.000000e+00 : f32
    %123 = vector.broadcast %cst_50 : f32 to vector<16x1xf32>
    %124 = arith.cmpf ogt, %122, %123 : vector<16x1xf32>
    %125 = tpu.reciprocal %122 {approx = true} : vector<16x1xf32> -> vector<16x1xf32>
    %cst_51 = arith.constant 0.000000e+00 : f32
    %126 = vector.broadcast %cst_51 : f32 to vector<16x1xf32>
    %127 = arith.select %124, %125, %126 : vector<16x1xi1>, vector<16x1xf32>
    %128 = vector.broadcast %127 : vector<16x1xf32> to vector<16x16xf32>
    %129 = arith.mulf %120, %128 : vector<16x16xf32>
    %130 = arith.truncf %129 : vector<16x16xf32> to vector<16x16xbf16>
    %cst_52 = arith.constant dense<0.000000e+00> : vector<16x16xf32>
    %131 = tpu.matmul %130, %111, %cst_52 {dimension_numbers = #tpu.dot_dimension_numbers<[1], [0], [0], [1], [0, 0, 1, 1], [], []>} : vector<16x16xbf16>, vector<16x16xbf16>, vector<16x16xf32> -> vector<16x16xf32>
    %c0_53 = arith.constant 0 : index
    %c48 = arith.constant 48 : index
    %132 = vector.load %arg24[%c0_53, %c48] : memref<16x64xf32, #tpu.memory_space<vmem>>, vector<16x16xf32>
    tpu.vector_store %arg24[%c0_53, %c48], %131 {strides = array<i32>} : memref<16x64xf32, #tpu.memory_space<vmem>>, vector<16x16xf32>,
    %c0_54 = arith.constant 0 : index
    %c0_55 = arith.constant 0 : index
    %133 = vector.load %arg24[%c0_54, %c0_55] : memref<16x64xf32, #tpu.memory_space<vmem>>, vector<16x64xf32>
    %134 = vector.extract_strided_slice %21 {offsets = [0, 192], sizes = [16, 64], strides = [1, 1]} : vector<16x256xf32> to vector<16x64xf32>
    %c0_56 = arith.constant 0 : index
    %c0_57 = arith.constant 0 : index
    %c0_58 = arith.constant 0 : index
    %135 = vector.load %arg13[%c0_56, %c0_57, %c0_58] : memref<1x2x64xf32, #tpu.memory_space<vmem>>, vector<1x2x64xf32>
    %136 = vector.shape_cast %135 : vector<1x2x64xf32> to vector<2x64xf32>
    %137 = vector.extract_strided_slice %136 {offsets = [0, 0], sizes = [1, 64], strides = [1, 1]} : vector<2x64xf32> to vector<1x64xf32>
    %138 = vector.broadcast %137 : vector<1x64xf32> to vector<16x64xf32>
    %139 = arith.mulf %133, %138 : vector<16x64xf32>
    %140 = vector.extract_strided_slice %136 {offsets = [1, 0], sizes = [1, 64], strides = [1, 1]} : vector<2x64xf32> to vector<1x64xf32>
    %141 = vector.broadcast %140 : vector<1x64xf32> to vector<16x64xf32>
    %142 = arith.mulf %134, %141 : vector<16x64xf32>
    %143 = arith.addf %139, %142 : vector<16x64xf32>
    %cst_59 = arith.constant dense<0.000000e+00> : vector<16xf32>
    %144 = vector.multi_reduction <add>, %143, %cst_59 [1] : vector<16x64xf32> to vector<16xf32>
    %145 = vector.shape_cast %144 : vector<16xf32> to vector<16x1xf32>
    %146 = arith.negf %145 : vector<16x1xf32>
    %147 = math.exp %146 : vector<16x1xf32>
    %cst_60 = arith.constant 1.000000e+00 : f32
    %148 = vector.broadcast %cst_60 : f32 to vector<16x1xf32>
    %149 = arith.addf %148, %147 : vector<16x1xf32>
    %150 = arith.divf %148, %149 : vector<16x1xf32>
    %151 = vector.broadcast %150 : vector<16x1xf32> to vector<16x64xf32>
    %152 = arith.mulf %151, %134 : vector<16x64xf32>
    %cst_61 = arith.constant 1.000000e+00 : f32
    %153 = vector.broadcast %cst_61 : f32 to vector<16x1xf32>
    %154 = arith.subf %153, %150 : vector<16x1xf32>
    %155 = vector.broadcast %154 : vector<16x1xf32> to vector<16x64xf32>
    %156 = arith.mulf %155, %133 : vector<16x64xf32>
    %157 = arith.addf %152, %156 : vector<16x64xf32>
    %158 = arith.index_cast %arg0 : i32 to index
    %c0_62 = arith.constant 0 : index
    %159 = memref.load %arg4[%158, %c0_62] : memref<2x2xf32, #tpu.memory_space<smem>>
    %160 = vector.broadcast %159 : f32 to vector<16x64xf32>
    %161 = arith.mulf %160, %14 : vector<16x64xf32>
    %162 = arith.index_cast %arg0 : i32 to index
    %c1 = arith.constant 1 : index
    %163 = memref.load %arg4[%162, %c1] : memref<2x2xf32, #tpu.memory_space<smem>>
    %164 = vector.broadcast %163 : f32 to vector<16x64xf32>
    %165 = arith.mulf %164, %157 : vector<16x64xf32>
    %166 = arith.addf %161, %165 : vector<16x64xf32>
    %c0_63 = arith.constant 0 : index
    %c0_64 = arith.constant 0 : index
    %c0_65 = arith.constant 0 : index
    %167 = vector.load %arg14[%c0_63, %c0_64, %c0_65] : memref<1x1x64xf32, #tpu.memory_space<vmem>>, vector<1x1x64xf32>
    %168 = vector.shape_cast %167 : vector<1x1x64xf32> to vector<1x64xf32>
    %c0_66 = arith.constant 0 : index
    %c0_67 = arith.constant 0 : index
    %c0_68 = arith.constant 0 : index
    %169 = vector.load %arg15[%c0_66, %c0_67, %c0_68] : memref<1x1x64xf32, #tpu.memory_space<vmem>>, vector<1x1x64xf32>
    %170 = vector.shape_cast %169 : vector<1x1x64xf32> to vector<1x64xf32>
    %cst_69 = arith.constant dense<0.000000e+00> : vector<16xf32>
    %171 = vector.multi_reduction <add>, %166, %cst_69 [1] : vector<16x64xf32> to vector<16xf32>
    %172 = vector.shape_cast %171 : vector<16xf32> to vector<16x1xf32>
    %cst_70 = arith.constant 6.400000e+01 : f32
    %173 = vector.broadcast %cst_70 : f32 to vector<16x1xf32>
    %174 = arith.divf %172, %173 : vector<16x1xf32>
    %175 = vector.broadcast %174 : vector<16x1xf32> to vector<16x64xf32>
    %176 = arith.subf %166, %175 : vector<16x64xf32>
    %177 = arith.mulf %176, %176 : vector<16x64xf32>
    %cst_71 = arith.constant dense<0.000000e+00> : vector<16xf32>
    %178 = vector.multi_reduction <add>, %177, %cst_71 [1] : vector<16x64xf32> to vector<16xf32>
    %179 = vector.shape_cast %178 : vector<16xf32> to vector<16x1xf32>
    %cst_72 = arith.constant 6.400000e+01 : f32
    %180 = vector.broadcast %cst_72 : f32 to vector<16x1xf32>
    %181 = arith.divf %179, %180 : vector<16x1xf32>
    %182 = vector.broadcast %174 : vector<16x1xf32> to vector<16x64xf32>
    %183 = arith.subf %166, %182 : vector<16x64xf32>
    %cst_73 = arith.constant 9.99999974E-6 : f32
    %184 = vector.broadcast %cst_73 : f32 to vector<16x1xf32>
    %185 = arith.addf %181, %184 : vector<16x1xf32>
    %186 = math.rsqrt %185 : vector<16x1xf32>
    %187 = vector.broadcast %186 : vector<16x1xf32> to vector<16x64xf32>
    %188 = arith.mulf %183, %187 : vector<16x64xf32>
    %189 = vector.broadcast %168 : vector<1x64xf32> to vector<16x64xf32>
    %190 = arith.mulf %188, %189 : vector<16x64xf32>
    %191 = vector.broadcast %170 : vector<1x64xf32> to vector<16x64xf32>
    %192 = arith.addf %190, %191 : vector<16x64xf32>
    %193 = arith.truncf %192 : vector<16x64xf32> to vector<16x64xbf16>
    %c0_74 = arith.constant 0 : index
    %c0_75 = arith.constant 0 : index
    %c0_76 = arith.constant 0 : index
    %194 = vector.load %arg16[%c0_74, %c0_75, %c0_76] : memref<1x64x128xbf16, #tpu.memory_space<vmem>>, vector<1x64x128xbf16>
    %195 = vector.shape_cast %194 : vector<1x64x128xbf16> to vector<64x128xbf16>
    %cst_77 = arith.constant dense<0.000000e+00> : vector<16x128xf32>
    %196 = tpu.matmul %193, %195, %cst_77 {dimension_numbers = #tpu.dot_dimension_numbers<[1], [0], [0], [1], [0, 0, 1, 1], [], []>} : vector<16x64xbf16>, vector<64x128xbf16>, vector<16x128xf32> -> vector<16x128xf32>
    %c0_78 = arith.constant 0 : index
    %c0_79 = arith.constant 0 : index
    %c0_80 = arith.constant 0 : index
    %197 = vector.load %arg17[%c0_78, %c0_79, %c0_80] : memref<1x1x128xf32, #tpu.memory_space<vmem>>, vector<1x1x128xf32>
    %198 = vector.shape_cast %197 : vector<1x1x128xf32> to vector<1x128xf32>
    %199 = vector.broadcast %198 : vector<1x128xf32> to vector<16x128xf32>
    %200 = arith.addf %196, %199 : vector<16x128xf32>
    %cst_81 = arith.constant 0.000000e+00 : f32
    %201 = vector.broadcast %cst_81 : f32 to vector<16x128xf32>
    %202 = arith.maximumf %200, %201 : vector<16x128xf32>
    %203 = arith.truncf %202 : vector<16x128xf32> to vector<16x128xbf16>
    %c0_82 = arith.constant 0 : index
    %c0_83 = arith.constant 0 : index
    %c0_84 = arith.constant 0 : index
    %204 = vector.load %arg18[%c0_82, %c0_83, %c0_84] : memref<1x128x64xbf16, #tpu.memory_space<vmem>>, vector<1x128x64xbf16>
    %205 = vector.shape_cast %204 : vector<1x128x64xbf16> to vector<128x64xbf16>
    %cst_85 = arith.constant dense<0.000000e+00> : vector<16x64xf32>
    %206 = tpu.matmul %203, %205, %cst_85 {dimension_numbers = #tpu.dot_dimension_numbers<[1], [0], [0], [1], [0, 0, 1, 1], [], []>} : vector<16x128xbf16>, vector<128x64xbf16>, vector<16x64xf32> -> vector<16x64xf32>
    %c0_86 = arith.constant 0 : index
    %c0_87 = arith.constant 0 : index
    %c0_88 = arith.constant 0 : index
    %207 = vector.load %arg19[%c0_86, %c0_87, %c0_88] : memref<1x1x64xf32, #tpu.memory_space<vmem>>, vector<1x1x64xf32>
    %208 = vector.shape_cast %207 : vector<1x1x64xf32> to vector<1x64xf32>
    %209 = vector.broadcast %208 : vector<1x64xf32> to vector<16x64xf32>
    %210 = arith.addf %206, %209 : vector<16x64xf32>
    %211 = arith.addf %210, %192 : vector<16x64xf32>
    %c0_89 = arith.constant 0 : index
    %c0_90 = arith.constant 0 : index
    %c0_91 = arith.constant 0 : index
    %212 = vector.load %arg20[%c0_89, %c0_90, %c0_91] : memref<1x1x64xf32, #tpu.memory_space<vmem>>, vector<1x1x64xf32>
    %213 = vector.shape_cast %212 : vector<1x1x64xf32> to vector<1x64xf32>
    %c0_92 = arith.constant 0 : index
    %c0_93 = arith.constant 0 : index
    %c0_94 = arith.constant 0 : index
    %214 = vector.load %arg21[%c0_92, %c0_93, %c0_94] : memref<1x1x64xf32, #tpu.memory_space<vmem>>, vector<1x1x64xf32>
    %215 = vector.shape_cast %214 : vector<1x1x64xf32> to vector<1x64xf32>
    %cst_95 = arith.constant dense<0.000000e+00> : vector<16xf32>
    %216 = vector.multi_reduction <add>, %211, %cst_95 [1] : vector<16x64xf32> to vector<16xf32>
    %217 = vector.shape_cast %216 : vector<16xf32> to vector<16x1xf32>
    %cst_96 = arith.constant 6.400000e+01 : f32
    %218 = vector.broadcast %cst_96 : f32 to vector<16x1xf32>
    %219 = arith.divf %217, %218 : vector<16x1xf32>
    %220 = vector.broadcast %219 : vector<16x1xf32> to vector<16x64xf32>
    %221 = arith.subf %211, %220 : vector<16x64xf32>
    %222 = arith.mulf %221, %221 : vector<16x64xf32>
    %cst_97 = arith.constant dense<0.000000e+00> : vector<16xf32>
    %223 = vector.multi_reduction <add>, %222, %cst_97 [1] : vector<16x64xf32> to vector<16xf32>
    %224 = vector.shape_cast %223 : vector<16xf32> to vector<16x1xf32>
    %cst_98 = arith.constant 6.400000e+01 : f32
    %225 = vector.broadcast %cst_98 : f32 to vector<16x1xf32>
    %226 = arith.divf %224, %225 : vector<16x1xf32>
    %227 = vector.broadcast %219 : vector<16x1xf32> to vector<16x64xf32>
    %228 = arith.subf %211, %227 : vector<16x64xf32>
    %cst_99 = arith.constant 9.99999974E-6 : f32
    %229 = vector.broadcast %cst_99 : f32 to vector<16x1xf32>
    %230 = arith.addf %226, %229 : vector<16x1xf32>
    %231 = math.rsqrt %230 : vector<16x1xf32>
    %232 = vector.broadcast %231 : vector<16x1xf32> to vector<16x64xf32>
    %233 = arith.mulf %228, %232 : vector<16x64xf32>
    %234 = vector.broadcast %213 : vector<1x64xf32> to vector<16x64xf32>
    %235 = arith.mulf %233, %234 : vector<16x64xf32>
    %236 = vector.broadcast %215 : vector<1x64xf32> to vector<16x64xf32>
    %237 = arith.addf %235, %236 : vector<16x64xf32>
    %c0_100 = arith.constant 0 : index
    %c0_101 = arith.constant 0 : index
    %238 = vector.load %arg23[%c0_100, %c0_101] : memref<16x64xf32, #tpu.memory_space<vmem>>, vector<16x64xf32>
    tpu.vector_store %arg23[%c0_100, %c0_101], %237 {strides = array<i32>} : memref<16x64xf32, #tpu.memory_space<vmem>>, vector<16x64xf32>,
    %c1_i32 = arith.constant 1 : i32
    %239 = arith.cmpi eq, %arg0, %c1_i32 : i32
    %240 = arith.extui %239 : i1 to i32
    %c0_i32_102 = arith.constant 0 : i32
    %241 = arith.cmpi ne, %240, %c0_i32_102 : i32
    scf.if %241 {
      %242 = arith.truncf %237 : vector<16x64xf32> to vector<16x64xbf16>
      %c0_103 = arith.constant 0 : index
      %c0_104 = arith.constant 0 : index
      %243 = vector.load %arg7[%c0_103, %c0_104] : memref<64x128xbf16, #tpu.memory_space<vmem>>, vector<64x128xbf16>
      %cst_105 = arith.constant dense<0.000000e+00> : vector<16x128xf32>
      %244 = tpu.matmul %242, %243, %cst_105 {dimension_numbers = #tpu.dot_dimension_numbers<[1], [0], [0], [1], [0, 0, 1, 1], [], []>} : vector<16x64xbf16>, vector<64x128xbf16>, vector<16x128xf32> -> vector<16x128xf32>
      %c0_106 = arith.constant 0 : index
      %c0_107 = arith.constant 0 : index
      %245 = vector.load %arg8[%c0_106, %c0_107] : memref<1x128xf32, #tpu.memory_space<vmem>>, vector<1x128xf32>
      %246 = vector.broadcast %245 : vector<1x128xf32> to vector<16x128xf32>
      %247 = arith.addf %244, %246 : vector<16x128xf32>
      %cst_108 = arith.constant dense<0xFF800000> : vector<16xf32>
      %248 = vector.multi_reduction <maximumf>, %247, %cst_108 [1] : vector<16x128xf32> to vector<16xf32>
      %249 = vector.shape_cast %248 : vector<16xf32> to vector<16x1xf32>
      %250 = vector.broadcast %249 : vector<16x1xf32> to vector<16x128xf32>
      %251 = arith.subf %247, %250 : vector<16x128xf32>
      %252 = math.exp %251 : vector<16x128xf32>
      %cst_109 = arith.constant dense<0.000000e+00> : vector<16xf32>
      %253 = vector.multi_reduction <add>, %252, %cst_109 [1] : vector<16x128xf32> to vector<16xf32>
      %254 = vector.shape_cast %253 : vector<16xf32> to vector<16x1xf32>
      %255 = math.log %254 : vector<16x1xf32>
      %256 = arith.addf %255, %249 : vector<16x1xf32>
      %257 = vector.broadcast %256 : vector<16x1xf32> to vector<16x128xf32>
      %258 = arith.subf %247, %257 : vector<16x128xf32>
      %c0_110 = arith.constant 0 : index
      %c0_111 = arith.constant 0 : index
      %259 = vector.load %arg22[%c0_110, %c0_111] : memref<16x128xf32, #tpu.memory_space<vmem>>, vector<16x128xf32>
      tpu.vector_store %arg22[%c0_110, %c0_111], %258 {strides = array<i32>} : memref<16x128xf32, #tpu.memory_space<vmem>>, vector<16x128xf32>,
    } else {
    }
    return
  }
  func.func @transform_0(%arg0: i32) -> (i32, i32) {
    %c0_i32 = arith.constant 0 : i32
    %c0_i32_0 = arith.constant 0 : i32
    %c0_i32_1 = arith.constant 0 : i32
    return %c0_i32, %c0_i32_0 : i32, i32
  }
  func.func @transform_1(%arg0: i32) -> (i32, i32) {
    %c0_i32 = arith.constant 0 : i32
    %c0_i32_0 = arith.constant 0 : i32
    %c0_i32_1 = arith.constant 0 : i32
    return %c0_i32, %c0_i32_0 : i32, i32
  }
  func.func @transform_2(%arg0: i32) -> (i32, i32) {
    %c0_i32 = arith.constant 0 : i32
    %c0_i32_0 = arith.constant 0 : i32
    %c0_i32_1 = arith.constant 0 : i32
    return %c0_i32, %c0_i32_0 : i32, i32
  }
  func.func @transform_3(%arg0: i32) -> (i32, i32) {
    %c0_i32 = arith.constant 0 : i32
    %c0_i32_0 = arith.constant 0 : i32
    %c0_i32_1 = arith.constant 0 : i32
    return %c0_i32, %c0_i32_0 : i32, i32
  }
  func.func @transform_4(%arg0: i32) -> (i32, i32) {
    %c0_i32 = arith.constant 0 : i32
    %c0_i32_0 = arith.constant 0 : i32
    %c0_i32_1 = arith.constant 0 : i32
    return %c0_i32, %c0_i32_0 : i32, i32
  }
  func.func @transform_5(%arg0: i32) -> (i32, i32) {
    %c0_i32 = arith.constant 0 : i32
    %c0_i32_0 = arith.constant 0 : i32
    %c0_i32_1 = arith.constant 0 : i32
    return %c0_i32, %c0_i32_0 : i32, i32
  }
  func.func @transform_6(%arg0: i32) -> (i32, i32) {
    %c0_i32 = arith.constant 0 : i32
    %c0_i32_0 = arith.constant 0 : i32
    %c0_i32_1 = arith.constant 0 : i32
    return %c0_i32, %c0_i32_0 : i32, i32
  }
  func.func @transform_7(%arg0: i32) -> (i32, i32) {
    %c0_i32 = arith.constant 0 : i32
    %c0_i32_0 = arith.constant 0 : i32
    %c0_i32_1 = arith.constant 0 : i32
    return %c0_i32, %c0_i32_0 : i32, i32
  }
  func.func @transform_8(%arg0: i32) -> (i32, i32, i32) {
    %c0_i32 = arith.constant 0 : i32
    %c0_i32_0 = arith.constant 0 : i32
    %c0_i32_1 = arith.constant 0 : i32
    return %arg0, %c0_i32, %c0_i32_0 : i32, i32, i32
  }
  func.func @transform_9(%arg0: i32) -> (i32, i32, i32) {
    %c0_i32 = arith.constant 0 : i32
    %c0_i32_0 = arith.constant 0 : i32
    %c0_i32_1 = arith.constant 0 : i32
    return %arg0, %c0_i32, %c0_i32_0 : i32, i32, i32
  }
  func.func @transform_10(%arg0: i32) -> (i32, i32, i32) {
    %c0_i32 = arith.constant 0 : i32
    %c0_i32_0 = arith.constant 0 : i32
    %c0_i32_1 = arith.constant 0 : i32
    return %arg0, %c0_i32, %c0_i32_0 : i32, i32, i32
  }
  func.func @transform_11(%arg0: i32) -> (i32, i32, i32) {
    %c0_i32 = arith.constant 0 : i32
    %c0_i32_0 = arith.constant 0 : i32
    %c0_i32_1 = arith.constant 0 : i32
    return %arg0, %c0_i32, %c0_i32_0 : i32, i32, i32
  }
  func.func @transform_12(%arg0: i32) -> (i32, i32, i32) {
    %c0_i32 = arith.constant 0 : i32
    %c0_i32_0 = arith.constant 0 : i32
    %c0_i32_1 = arith.constant 0 : i32
    return %arg0, %c0_i32, %c0_i32_0 : i32, i32, i32
  }
  func.func @transform_13(%arg0: i32) -> (i32, i32, i32) {
    %c0_i32 = arith.constant 0 : i32
    %c0_i32_0 = arith.constant 0 : i32
    %c0_i32_1 = arith.constant 0 : i32
    return %arg0, %c0_i32, %c0_i32_0 : i32, i32, i32
  }
  func.func @transform_14(%arg0: i32) -> (i32, i32, i32) {
    %c0_i32 = arith.constant 0 : i32
    %c0_i32_0 = arith.constant 0 : i32
    %c0_i32_1 = arith.constant 0 : i32
    return %arg0, %c0_i32, %c0_i32_0 : i32, i32, i32
  }
  func.func @transform_15(%arg0: i32) -> (i32, i32, i32) {
    %c0_i32 = arith.constant 0 : i32
    %c0_i32_0 = arith.constant 0 : i32
    %c0_i32_1 = arith.constant 0 : i32
    return %arg0, %c0_i32, %c0_i32_0 : i32, i32, i32
  }
  func.func @transform_16(%arg0: i32) -> (i32, i32, i32) {
    %c0_i32 = arith.constant 0 : i32
    %c0_i32_0 = arith.constant 0 : i32
    %c0_i32_1 = arith.constant 0 : i32
    return %arg0, %c0_i32, %c0_i32_0 : i32, i32, i32
  }
  func.func @transform_17(%arg0: i32) -> (i32, i32, i32) {
    %c0_i32 = arith.constant 0 : i32
    %c0_i32_0 = arith.constant 0 : i32
    %c0_i32_1 = arith.constant 0 : i32
    return %arg0, %c0_i32, %c0_i32_0 : i32, i32, i32
  }
  func.func @transform_18(%arg0: i32) -> (i32, i32, i32) {
    %c0_i32 = arith.constant 0 : i32
    %c0_i32_0 = arith.constant 0 : i32
    %c0_i32_1 = arith.constant 0 : i32
    return %arg0, %c0_i32, %c0_i32_0 : i32, i32, i32
  }
  func.func @transform_19(%arg0: i32) -> (i32, i32, i32) {
    %c0_i32 = arith.constant 0 : i32
    %c0_i32_0 = arith.constant 0 : i32
    %c0_i32_1 = arith.constant 0 : i32
    return %arg0, %c0_i32, %c0_i32_0 : i32, i32, i32
  }
  func.func @transform_20(%arg0: i32) -> (i32, i32, i32) {
    %c0_i32 = arith.constant 0 : i32
    %c0_i32_0 = arith.constant 0 : i32
    %c0_i32_1 = arith.constant 0 : i32
    return %arg0, %c0_i32, %c0_i32_0 : i32, i32, i32
  }
  func.func @transform_21(%arg0: i32) -> (i32, i32) {
    %c0_i32 = arith.constant 0 : i32
    %c0_i32_0 = arith.constant 0 : i32
    %c0_i32_1 = arith.constant 0 : i32
    return %c0_i32, %c0_i32_0 : i32, i32
  }
}

</mosaic_0001>

<llo_original>
// kernel: gps_node_forward.1
$region0: #{gps_node_forward.1}
  #allocation0 [shape = 'u32[]', space=smem, size = 0x4, offset = 0x4, fixed_abs, tag = 'smem constant byte address 0x4 - core index']
  #allocation1 [shape = 'u32[144,128]{1,0:T(1,128)}', space=vmem, size = 0x12000, scoped, tag = 'internal scratch']
  #allocation2 [shape = 'f32[16,64]{1,0:T(8,128)}', space=vmem, size = 0x2000, scoped, tag = 'scratch operand']
  #allocation3 [shape = 'f32[16,64]{1,0:T(8,128)}', space=vmem, size = 0x2000, scoped, tag = 'scratch operand']
  %s0 = inlined_call_operand.vmem [shape: f32[16,8], index: 0, kind: input, shape index: {}]
  %s1 = inlined_call_operand.vmem [shape: f32[16,16], index: 1, kind: input, shape index: {}]
  %s2 = inlined_call_operand.vmem [shape: bf16[16,16], index: 2, kind: input, shape index: {}]
  %s3 = inlined_call_operand.vmem [shape: f32[2,2], index: 3, kind: input, shape index: {}]
  %s4 = inlined_call_operand.vmem [shape: bf16[8,64], index: 4, kind: input, shape index: {}]
  %s5 = inlined_call_operand.vmem [shape: f32[1,64], index: 5, kind: input, shape index: {}]
  %s6 = inlined_call_operand.vmem [shape: bf16[64,128], index: 6, kind: input, shape index: {}]
  %s7 = inlined_call_operand.vmem [shape: f32[1,128], index: 7, kind: input, shape index: {}]
  %s8 = inlined_call_operand.vmem [shape: bf16[2,64,64], index: 8, kind: input, shape index: {}]
  %s9 = inlined_call_operand.vmem [shape: f32[2,1,64], index: 9, kind: input, shape index: {}]
  %s10 = inlined_call_operand.vmem [shape: bf16[2,64,256], index: 10, kind: input, shape index: {}]
  %s11 = inlined_call_operand.vmem [shape: f32[2,1,256], index: 11, kind: input, shape index: {}]
  %s12 = inlined_call_operand.vmem [shape: f32[2,2,64], index: 12, kind: input, shape index: {}]
  %s13 = inlined_call_operand.vmem [shape: f32[2,1,64], index: 13, kind: input, shape index: {}]
  %s14 = inlined_call_operand.vmem [shape: f32[2,1,64], index: 14, kind: input, shape index: {}]
  %s15 = inlined_call_operand.vmem [shape: bf16[2,64,128], index: 15, kind: input, shape index: {}]
  %s16 = inlined_call_operand.vmem [shape: f32[2,1,128], index: 16, kind: input, shape index: {}]
  %s17 = inlined_call_operand.vmem [shape: bf16[2,128,64], index: 17, kind: input, shape index: {}]
  %s18 = inlined_call_operand.vmem [shape: f32[2,1,64], index: 18, kind: input, shape index: {}]
  %s19 = inlined_call_operand.vmem [shape: f32[2,1,64], index: 19, kind: input, shape index: {}]
  %s20 = inlined_call_operand.vmem [shape: f32[2,1,64], index: 20, kind: input, shape index: {}]
  %s21 = inlined_call_operand.vmem [shape: f32[16,128], index: 21, kind: output, shape index: {}]
  %s22 = sld [smem:[#allocation0]]
  $region129: #{gps_node_forward.1} parent=0
    _
  %s24 = ssub.s32 1, %s22
  %s25 = scalar_select 0, %s24, %s22
  $region1: #{gps_node_forward.1} parent=0
    #allocation4 [shape = 'u8[1024]{0}', space=smem, size = 0x400, scoped, tag = 'input window, operand 3, single buffered']
    #allocation5 [shape = 's32[2]{0}', space=sflag, size = 0x8, scoped, tag = 'scoped memory for gps_node_forward.1']
    %26 = vsyncpa [#allocation5], 0
    loop: start=0, step=1, limit=4
    $region2: #{gps_node_forward.1} parent=1 // loop_pre_header
      _
    $region3: #{gps_node_forward.1} parent=1 // loop_header
      %s28 = sphi 0, %s32
      %p29 = scmp.ge.s32.totalorder %s28, 4
      %s36 = sphi 0, %s36
      %s38 = sphi 0, %s36
      %s39 = sphi 0, %s38
      %s53 = sphi 0, %s39
      %s57 = sphi 0, %s57
      %s59 = sphi 0, %s57
      %s60 = sphi 0, %s59
      %s74 = sphi 0, %s60
      %s78 = sphi 0, %s78
      %s80 = sphi 0, %s78
      %s81 = sphi 0, %s80
      %s95 = sphi 0, %s81
      %s99 = sphi 0, %s99
      %s101 = sphi 0, %s99
      %s102 = sphi 0, %s101
      %s116 = sphi 0, %s102
      %s120 = sphi 0, %s120
      %s122 = sphi 0, %s120
      %s123 = sphi 0, %s122
      %s137 = sphi 0, %s123
      %s141 = sphi 0, %s141
      %s143 = sphi 0, %s141
      %s144 = sphi 0, %s143
      %s158 = sphi 0, %s144
      %s162 = sphi 0, %s162
      %s164 = sphi 0, %s162
      %s165 = sphi 0, %s164
      %s179 = sphi 0, %s165
      %s183 = sphi 0, %s183
      %s185 = sphi 0, %s183
      %s186 = sphi 0, %s185
      %s200 = sphi 0, %s186
      %s206 = sphi 0, %s208
      %s209 = sphi 0, %s206
      %s210 = sphi 0, %s209
      %s226 = sphi 0, %s210
      %s232 = sphi 0, %s234
      %s235 = sphi 0, %s232
      %s236 = sphi 0, %s235
      %s252 = sphi 0, %s236
      %s258 = sphi 0, %s260
      %s261 = sphi 0, %s258
      %s262 = sphi 0, %s261
      %s278 = sphi 0, %s262
      %s284 = sphi 0, %s286
      %s287 = sphi 0, %s284
      %s288 = sphi 0, %s287
      %s304 = sphi 0, %s288
      %s310 = sphi 0, %s312
      %s313 = sphi 0, %s310
      %s314 = sphi 0, %s313
      %s330 = sphi 0, %s314
      %s336 = sphi 0, %s338
      %s339 = sphi 0, %s336
      %s340 = sphi 0, %s339
      %s356 = sphi 0, %s340
      %s362 = sphi 0, %s364
      %s365 = sphi 0, %s362
      %s366 = sphi 0, %s365
      %s382 = sphi 0, %s366
      %s388 = sphi 0, %s390
      %s391 = sphi 0, %s388
      %s392 = sphi 0, %s391
      %s408 = sphi 0, %s392
      %s414 = sphi 0, %s416
      %s417 = sphi 0, %s414
      %s418 = sphi 0, %s417
      %s434 = sphi 0, %s418
      %s440 = sphi 0, %s442
      %s443 = sphi 0, %s440
      %s444 = sphi 0, %s443
      %s460 = sphi 0, %s444
      %s466 = sphi 0, %s468
      %s469 = sphi 0, %s466
      %s470 = sphi 0, %s469
      %s486 = sphi 0, %s470
      %s492 = sphi 0, %s494
      %s495 = sphi 0, %s492
      %s496 = sphi 0, %s495
      %s512 = sphi 0, %s496
      %s518 = sphi 0, %s520
      %s521 = sphi 0, %s518
      %s522 = sphi 0, %s521
      %s538 = sphi 0, %s522
      %s542 = sphi 0, %s542
      %s544 = sphi 0, %s542
      %s545 = sphi 0, %s544
      %s559 = sphi 0, %s545
    $region4: #{gps_node_forward.1} parent=1 // loop_header_branch
      %31 = sbr.rel (%p29) target = $region8
    $region5: #{gps_node_forward.1} parent=1 // loop_body
      %s33 = ssub.s32 %s28, 1
      %s34 = ssub.s32 %s28, 2
      %s35 = sadd.s32 %s28, 1
      %s37 = sadd.s32 %s36, 1
      %p40 = scmp.eq.s32.totalorder %s28, 1
      %p41 = scmp.ne.s32.totalorder %s36, %s38
      %p42 = scmp.eq.s32.totalorder %s28, 0
      %p43 = por %p41, %p42
      %p44 = scmp.ne.s32.totalorder %s36, %s38
      %p45 = scmp.eq.s32.totalorder %s33, 1
      %p46 = por %p44, %p45
      %p47 = scmp.ne.s32.totalorder %s38, %s39
      %p48 = scmp.eq.s32.totalorder %s33, 0
      %p49 = por %p47, %p48
      %p50 = scmp.ne.s32.totalorder %s38, %s39
      %p51 = scmp.eq.s32.totalorder %s34, 1
      %p52 = por %p50, %p51
      %p54 = scmp.ne.s32.totalorder %s39, %s53
      %p55 = scmp.eq.s32.totalorder %s34, 0
      %p56 = por %p54, %p55
      %s58 = sadd.s32 %s57, 1
      %p61 = scmp.eq.s32.totalorder %s28, 1
      %p62 = scmp.ne.s32.totalorder %s57, %s59
      %p63 = scmp.eq.s32.totalorder %s28, 0
      %p64 = por %p62, %p63
      %p65 = scmp.ne.s32.totalorder %s57, %s59
      %p66 = scmp.eq.s32.totalorder %s33, 1
      %p67 = por %p65, %p66
      %p68 = scmp.ne.s32.totalorder %s59, %s60
      %p69 = scmp.eq.s32.totalorder %s33, 0
      %p70 = por %p68, %p69
      %p71 = scmp.ne.s32.totalorder %s59, %s60
      %p72 = scmp.eq.s32.totalorder %s34, 1
      %p73 = por %p71, %p72
      %p75 = scmp.ne.s32.totalorder %s60, %s74
      %p76 = scmp.eq.s32.totalorder %s34, 0
      %p77 = por %p75, %p76
      %s79 = sadd.s32 %s78, 1
      %p82 = scmp.eq.s32.totalorder %s28, 1
      %p83 = scmp.ne.s32.totalorder %s78, %s80
      %p84 = scmp.eq.s32.totalorder %s28, 0
      %p85 = por %p83, %p84
      %p86 = scmp.ne.s32.totalorder %s78, %s80
      %p87 = scmp.eq.s32.totalorder %s33, 1
      %p88 = por %p86, %p87
      %p89 = scmp.ne.s32.totalorder %s80, %s81
      %p90 = scmp.eq.s32.totalorder %s33, 0
      %p91 = por %p89, %p90
      %p92 = scmp.ne.s32.totalorder %s80, %s81
      %p93 = scmp.eq.s32.totalorder %s34, 1
      %p94 = por %p92, %p93
      %p96 = scmp.ne.s32.totalorder %s81, %s95
      %p97 = scmp.eq.s32.totalorder %s34, 0
      %p98 = por %p96, %p97
      %s100 = sadd.s32 %s99, 1
      %p103 = scmp.eq.s32.totalorder %s28, 1
      %p104 = scmp.ne.s32.totalorder %s99, %s101
      %p105 = scmp.eq.s32.totalorder %s28, 0
      %p106 = por %p104, %p105
      %p107 = scmp.ne.s32.totalorder %s99, %s101
      %p108 = scmp.eq.s32.totalorder %s33, 1
      %p109 = por %p107, %p108
      %p110 = scmp.ne.s32.totalorder %s101, %s102
      %p111 = scmp.eq.s32.totalorder %s33, 0
      %p112 = por %p110, %p111
      %p113 = scmp.ne.s32.totalorder %s101, %s102
      %p114 = scmp.eq.s32.totalorder %s34, 1
      %p115 = por %p113, %p114
      %p117 = scmp.ne.s32.totalorder %s102, %s116
      %p118 = scmp.eq.s32.totalorder %s34, 0
      %p119 = por %p117, %p118
      %s121 = sadd.s32 %s120, 1
      %p124 = scmp.eq.s32.totalorder %s28, 1
      %p125 = scmp.ne.s32.totalorder %s120, %s122
      %p126 = scmp.eq.s32.totalorder %s28, 0
      %p127 = por %p125, %p126
      %p128 = scmp.ne.s32.totalorder %s120, %s122
      %p129 = scmp.eq.s32.totalorder %s33, 1
      %p130 = por %p128, %p129
      %p131 = scmp.ne.s32.totalorder %s122, %s123
      %p132 = scmp.eq.s32.totalorder %s33, 0
      %p133 = por %p131, %p132
      %p134 = scmp.ne.s32.totalorder %s122, %s123
      %p135 = scmp.eq.s32.totalorder %s34, 1
      %p136 = por %p134, %p135
      %p138 = scmp.ne.s32.totalorder %s123, %s137
      %p139 = scmp.eq.s32.totalorder %s34, 0
      %p140 = por %p138, %p139
      %s142 = sadd.s32 %s141, 1
      %p145 = scmp.eq.s32.totalorder %s28, 1
      %p146 = scmp.ne.s32.totalorder %s141, %s143
      %p147 = scmp.eq.s32.totalorder %s28, 0
      %p148 = por %p146, %p147
      %p149 = scmp.ne.s32.totalorder %s141, %s143
      %p150 = scmp.eq.s32.totalorder %s33, 1
      %p151 = por %p149, %p150
      %p152 = scmp.ne.s32.totalorder %s143, %s144
      %p153 = scmp.eq.s32.totalorder %s33, 0
      %p154 = por %p152, %p153
      %p155 = scmp.ne.s32.totalorder %s143, %s144
      %p156 = scmp.eq.s32.totalorder %s34, 1
      %p157 = por %p155, %p156
      %p159 = scmp.ne.s32.totalorder %s144, %s158
      %p160 = scmp.eq.s32.totalorder %s34, 0
      %p161 = por %p159, %p160
      %s163 = sadd.s32 %s162, 1
      %p166 = scmp.eq.s32.totalorder %s28, 1
      %p167 = scmp.ne.s32.totalorder %s162, %s164
      %p168 = scmp.eq.s32.totalorder %s28, 0
      %p169 = por %p167, %p168
      %p170 = scmp.ne.s32.totalorder %s162, %s164
      %p171 = scmp.eq.s32.totalorder %s33, 1
      %p172 = por %p170, %p171
      %p173 = scmp.ne.s32.totalorder %s164, %s165
      %p174 = scmp.eq.s32.totalorder %s33, 0
      %p175 = por %p173, %p174
      %p176 = scmp.ne.s32.totalorder %s164, %s165
      %p177 = scmp.eq.s32.totalorder %s34, 1
      %p178 = por %p176, %p177
      %p180 = scmp.ne.s32.totalorder %s165, %s179
      %p181 = scmp.eq.s32.totalorder %s34, 0
      %p182 = por %p180, %p181
      %s184 = sadd.s32 %s183, 1
      %p187 = scmp.eq.s32.totalorder %s28, 1
      %p188 = scmp.ne.s32.totalorder %s183, %s185
      %p189 = scmp.eq.s32.totalorder %s28, 0
      %p190 = por %p188, %p189
      %p191 = scmp.ne.s32.totalorder %s183, %s185
      %p192 = scmp.eq.s32.totalorder %s33, 1
      %p193 = por %p191, %p192
      %p194 = scmp.ne.s32.totalorder %s185, %s186
      %p195 = scmp.eq.s32.totalorder %s33, 0
      %p196 = por %p194, %p195
      %p197 = scmp.ne.s32.totalorder %s185, %s186
      %p198 = scmp.eq.s32.totalorder %s34, 1
      %p199 = por %p197, %p198
      %p201 = scmp.ne.s32.totalorder %s186, %s200
      %p202 = scmp.eq.s32.totalorder %s34, 0
      %p203 = por %p201, %p202
      %s204 = ssub.s32 %s28, %s35
      %p205 = scmp.eq.s32.totalorder %s204, 0
      %s207 = sadd.s32 %s206, 1
      %s208 = scalar_select %p205, %s206, %s207
      %p211 = pneg %p205
      %p212 = scmp.eq.s32.totalorder %s28, 1
      %p213 = por %p211, %p212
      %p214 = scmp.ne.s32.totalorder %s206, %s209
      %p215 = scmp.eq.s32.totalorder %s28, 0
      %p216 = por %p214, %p215
      %p217 = scmp.ne.s32.totalorder %s206, %s209
      %p218 = scmp.eq.s32.totalorder %s33, 1
      %p219 = por %p217, %p218
      %p220 = scmp.ne.s32.totalorder %s209, %s210
      %p221 = scmp.eq.s32.totalorder %s33, 0
      %p222 = por %p220, %p221
      %p223 = scmp.ne.s32.totalorder %s209, %s210
      %p224 = scmp.eq.s32.totalorder %s34, 1
      %p225 = por %p223, %p224
      %p227 = scmp.ne.s32.totalorder %s210, %s226
      %p228 = scmp.eq.s32.totalorder %s34, 0
      %p229 = por %p227, %p228
      %s230 = ssub.s32 %s28, %s35
      %p231 = scmp.eq.s32.totalorder %s230, 0
      %s233 = sadd.s32 %s232, 1
      %s234 = scalar_select %p231, %s232, %s233
      %p237 = pneg %p231
      %p238 = scmp.eq.s32.totalorder %s28, 1
      %p239 = por %p237, %p238
      %p240 = scmp.ne.s32.totalorder %s232, %s235
      %p241 = scmp.eq.s32.totalorder %s28, 0
      %p242 = por %p240, %p241
      %p243 = scmp.ne.s32.totalorder %s232, %s235
      %p244 = scmp.eq.s32.totalorder %s33, 1
      %p245 = por %p243, %p244
      %p246 = scmp.ne.s32.totalorder %s235, %s236
      %p247 = scmp.eq.s32.totalorder %s33, 0
      %p248 = por %p246, %p247
      %p249 = scmp.ne.s32.totalorder %s235, %s236
      %p250 = scmp.eq.s32.totalorder %s34, 1
      %p251 = por %p249, %p250
      %p253 = scmp.ne.s32.totalorder %s236, %s252
      %p254 = scmp.eq.s32.totalorder %s34, 0
      %p255 = por %p253, %p254
      %s256 = ssub.s32 %s28, %s35
      %p257 = scmp.eq.s32.totalorder %s256, 0
      %s259 = sadd.s32 %s258, 1
      %s260 = scalar_select %p257, %s258, %s259
      %p263 = pneg %p257
      %p264 = scmp.eq.s32.totalorder %s28, 1
      %p265 = por %p263, %p264
      %p266 = scmp.ne.s32.totalorder %s258, %s261
      %p267 = scmp.eq.s32.totalorder %s28, 0
      %p268 = por %p266, %p267
      %p269 = scmp.ne.s32.totalorder %s258, %s261
      %p270 = scmp.eq.s32.totalorder %s33, 1
      %p271 = por %p269, %p270
      %p272 = scmp.ne.s32.totalorder %s261, %s262
      %p273 = scmp.eq.s32.totalorder %s33, 0
      %p274 = por %p272, %p273
      %p275 = scmp.ne.s32.totalorder %s261, %s262
      %p276 = scmp.eq.s32.totalorder %s34, 1
      %p277 = por %p275, %p276
      %p279 = scmp.ne.s32.totalorder %s262, %s278
      %p280 = scmp.eq.s32.totalorder %s34, 0
      %p281 = por %p279, %p280
      %s282 = ssub.s32 %s28, %s35
      %p283 = scmp.eq.s32.totalorder %s282, 0
      %s285 = sadd.s32 %s284, 1
      %s286 = scalar_select %p283, %s284, %s285
      %p289 = pneg %p283
      %p290 = scmp.eq.s32.totalorder %s28, 1
      %p291 = por %p289, %p290
      %p292 = scmp.ne.s32.totalorder %s284, %s287
      %p293 = scmp.eq.s32.totalorder %s28, 0
      %p294 = por %p292, %p293
      %p295 = scmp.ne.s32.totalorder %s284, %s287
      %p296 = scmp.eq.s32.totalorder %s33, 1
      %p297 = por %p295, %p296
      %p298 = scmp.ne.s32.totalorder %s287, %s288
      %p299 = scmp.eq.s32.totalorder %s33, 0
      %p300 = por %p298, %p299
      %p301 = scmp.ne.s32.totalorder %s287, %s288
      %p302 = scmp.eq.s32.totalorder %s34, 1
      %p303 = por %p301, %p302
      %p305 = scmp.ne.s32.totalorder %s288, %s304
      %p306 = scmp.eq.s32.totalorder %s34, 0
      %p307 = por %p305, %p306
      %s308 = ssub.s32 %s28, %s35
      %p309 = scmp.eq.s32.totalorder %s308, 0
      %s311 = sadd.s32 %s310, 1
      %s312 = scalar_select %p309, %s310, %s311
      %p315 = pneg %p309
      %p316 = scmp.eq.s32.totalorder %s28, 1
      %p317 = por %p315, %p316
      %p318 = scmp.ne.s32.totalorder %s310, %s313
      %p319 = scmp.eq.s32.totalorder %s28, 0
      %p320 = por %p318, %p319
      %p321 = scmp.ne.s32.totalorder %s310, %s313
      %p322 = scmp.eq.s32.totalorder %s33, 1
      %p323 = por %p321, %p322
      %p324 = scmp.ne.s32.totalorder %s313, %s314
      %p325 = scmp.eq.s32.totalorder %s33, 0
      %p326 = por %p324, %p325
      %p327 = scmp.ne.s32.totalorder %s313, %s314
      %p328 = scmp.eq.s32.totalorder %s34, 1
      %p329 = por %p327, %p328
      %p331 = scmp.ne.s32.totalorder %s314, %s330
      %p332 = scmp.eq.s32.totalorder %s34, 0
      %p333 = por %p331, %p332
      %s334 = ssub.s32 %s28, %s35
      %p335 = scmp.eq.s32.totalorder %s334, 0
      %s337 = sadd.s32 %s336, 1
      %s338 = scalar_select %p335, %s336, %s337
      %p341 = pneg %p335
      %p342 = scmp.eq.s32.totalorder %s28, 1
      %p343 = por %p341, %p342
      %p344 = scmp.ne.s32.totalorder %s336, %s339
      %p345 = scmp.eq.s32.totalorder %s28, 0
      %p346 = por %p344, %p345
      %p347 = scmp.ne.s32.totalorder %s336, %s339
      %p348 = scmp.eq.s32.totalorder %s33, 1
      %p349 = por %p347, %p348
      %p350 = scmp.ne.s32.totalorder %s339, %s340
      %p351 = scmp.eq.s32.totalorder %s33, 0
      %p352 = por %p350, %p351
      %p353 = scmp.ne.s32.totalorder %s339, %s340
      %p354 = scmp.eq.s32.totalorder %s34, 1
      %p355 = por %p353, %p354
      %p357 = scmp.ne.s32.totalorder %s340, %s356
      %p358 = scmp.eq.s32.totalorder %s34, 0
      %p359 = por %p357, %p358
      %s360 = ssub.s32 %s28, %s35
      %p361 = scmp.eq.s32.totalorder %s360, 0
      %s363 = sadd.s32 %s362, 1
      %s364 = scalar_select %p361, %s362, %s363
      %p367 = pneg %p361
      %p368 = scmp.eq.s32.totalorder %s28, 1
      %p369 = por %p367, %p368
      %p370 = scmp.ne.s32.totalorder %s362, %s365
      %p371 = scmp.eq.s32.totalorder %s28, 0
      %p372 = por %p370, %p371
      %p373 = scmp.ne.s32.totalorder %s362, %s365
      %p374 = scmp.eq.s32.totalorder %s33, 1
      %p375 = por %p373, %p374
      %p376 = scmp.ne.s32.totalorder %s365, %s366
      %p377 = scmp.eq.s32.totalorder %s33, 0
      %p378 = por %p376, %p377
      %p379 = scmp.ne.s32.totalorder %s365, %s366
      %p380 = scmp.eq.s32.totalorder %s34, 1
      %p381 = por %p379, %p380
      %p383 = scmp.ne.s32.totalorder %s366, %s382
      %p384 = scmp.eq.s32.totalorder %s34, 0
      %p385 = por %p383, %p384
      %s386 = ssub.s32 %s28, %s35
      %p387 = scmp.eq.s32.totalorder %s386, 0
      %s389 = sadd.s32 %s388, 1
      %s390 = scalar_select %p387, %s388, %s389
      %p393 = pneg %p387
      %p394 = scmp.eq.s32.totalorder %s28, 1
      %p395 = por %p393, %p394
      %p396 = scmp.ne.s32.totalorder %s388, %s391
      %p397 = scmp.eq.s32.totalorder %s28, 0
      %p398 = por %p396, %p397
      %p399 = scmp.ne.s32.totalorder %s388, %s391
      %p400 = scmp.eq.s32.totalorder %s33, 1
      %p401 = por %p399, %p400
      %p402 = scmp.ne.s32.totalorder %s391, %s392
      %p403 = scmp.eq.s32.totalorder %s33, 0
      %p404 = por %p402, %p403
      %p405 = scmp.ne.s32.totalorder %s391, %s392
      %p406 = scmp.eq.s32.totalorder %s34, 1
      %p407 = por %p405, %p406
      %p409 = scmp.ne.s32.totalorder %s392, %s408
      %p410 = scmp.eq.s32.totalorder %s34, 0
      %p411 = por %p409, %p410
      %s412 = ssub.s32 %s28, %s35
      %p413 = scmp.eq.s32.totalorder %s412, 0
      %s415 = sadd.s32 %s414, 1
      %s416 = scalar_select %p413, %s414, %s415
      %p419 = pneg %p413
      %p420 = scmp.eq.s32.totalorder %s28, 1
      %p421 = por %p419, %p420
      %p422 = scmp.ne.s32.totalorder %s414, %s417
      %p423 = scmp.eq.s32.totalorder %s28, 0
      %p424 = por %p422, %p423
      %p425 = scmp.ne.s32.totalorder %s414, %s417
      %p426 = scmp.eq.s32.totalorder %s33, 1
      %p427 = por %p425, %p426
      %p428 = scmp.ne.s32.totalorder %s417, %s418
      %p429 = scmp.eq.s32.totalorder %s33, 0
      %p430 = por %p428, %p429
      %p431 = scmp.ne.s32.totalorder %s417, %s418
      %p432 = scmp.eq.s32.totalorder %s34, 1
      %p433 = por %p431, %p432
      %p435 = scmp.ne.s32.totalorder %s418, %s434
      %p436 = scmp.eq.s32.totalorder %s34, 0
      %p437 = por %p435, %p436
      %s438 = ssub.s32 %s28, %s35
      %p439 = scmp.eq.s32.totalorder %s438, 0
      %s441 = sadd.s32 %s440, 1
      %s442 = scalar_select %p439, %s440, %s441
      %p445 = pneg %p439
      %p446 = scmp.eq.s32.totalorder %s28, 1
      %p447 = por %p445, %p446
      %p448 = scmp.ne.s32.totalorder %s440, %s443
      %p449 = scmp.eq.s32.totalorder %s28, 0
      %p450 = por %p448, %p449
      %p451 = scmp.ne.s32.totalorder %s440, %s443
      %p452 = scmp.eq.s32.totalorder %s33, 1
      %p453 = por %p451, %p452
      %p454 = scmp.ne.s32.totalorder %s443, %s444
      %p455 = scmp.eq.s32.totalorder %s33, 0
      %p456 = por %p454, %p455
      %p457 = scmp.ne.s32.totalorder %s443, %s444
      %p458 = scmp.eq.s32.totalorder %s34, 1
      %p459 = por %p457, %p458
      %p461 = scmp.ne.s32.totalorder %s444, %s460
      %p462 = scmp.eq.s32.totalorder %s34, 0
      %p463 = por %p461, %p462
      %s464 = ssub.s32 %s28, %s35
      %p465 = scmp.eq.s32.totalorder %s464, 0
      %s467 = sadd.s32 %s466, 1
      %s468 = scalar_select %p465, %s466, %s467
      %p471 = pneg %p465
      %p472 = scmp.eq.s32.totalorder %s28, 1
      %p473 = por %p471, %p472
      %p474 = scmp.ne.s32.totalorder %s466, %s469
      %p475 = scmp.eq.s32.totalorder %s28, 0
      %p476 = por %p474, %p475
      %p477 = scmp.ne.s32.totalorder %s466, %s469
      %p478 = scmp.eq.s32.totalorder %s33, 1
      %p479 = por %p477, %p478
      %p480 = scmp.ne.s32.totalorder %s469, %s470
      %p481 = scmp.eq.s32.totalorder %s33, 0
      %p482 = por %p480, %p481
      %p483 = scmp.ne.s32.totalorder %s469, %s470
      %p484 = scmp.eq.s32.totalorder %s34, 1
      %p485 = por %p483, %p484
      %p487 = scmp.ne.s32.totalorder %s470, %s486
      %p488 = scmp.eq.s32.totalorder %s34, 0
      %p489 = por %p487, %p488
      %s490 = ssub.s32 %s28, %s35
      %p491 = scmp.eq.s32.totalorder %s490, 0
      %s493 = sadd.s32 %s492, 1
      %s494 = scalar_select %p491, %s492, %s493
      %p497 = pneg %p491
      %p498 = scmp.eq.s32.totalorder %s28, 1
      %p499 = por %p497, %p498
      %p500 = scmp.ne.s32.totalorder %s492, %s495
      %p501 = scmp.eq.s32.totalorder %s28, 0
      %p502 = por %p500, %p501
      %p503 = scmp.ne.s32.totalorder %s492, %s495
      %p504 = scmp.eq.s32.totalorder %s33, 1
      %p505 = por %p503, %p504
      %p506 = scmp.ne.s32.totalorder %s495, %s496
      %p507 = scmp.eq.s32.totalorder %s33, 0
      %p508 = por %p506, %p507
      %p509 = scmp.ne.s32.totalorder %s495, %s496
      %p510 = scmp.eq.s32.totalorder %s34, 1
      %p511 = por %p509, %p510
      %p513 = scmp.ne.s32.totalorder %s496, %s512
      %p514 = scmp.eq.s32.totalorder %s34, 0
      %p515 = por %p513, %p514
      %s516 = ssub.s32 %s28, %s35
      %p517 = scmp.eq.s32.totalorder %s516, 0
      %s519 = sadd.s32 %s518, 1
      %s520 = scalar_select %p517, %s518, %s519
      %p523 = pneg %p517
      %p524 = scmp.eq.s32.totalorder %s28, 1
      %p525 = por %p523, %p524
      %p526 = scmp.ne.s32.totalorder %s518, %s521
      %p527 = scmp.eq.s32.totalorder %s28, 0
      %p528 = por %p526, %p527
      %p529 = scmp.ne.s32.totalorder %s518, %s521
      %p530 = scmp.eq.s32.totalorder %s33, 1
      %p531 = por %p529, %p530
      %p532 = scmp.ne.s32.totalorder %s521, %s522
      %p533 = scmp.eq.s32.totalorder %s33, 0
      %p534 = por %p532, %p533
      %p535 = scmp.ne.s32.totalorder %s521, %s522
      %p536 = scmp.eq.s32.totalorder %s34, 1
      %p537 = por %p535, %p536
      %p539 = scmp.ne.s32.totalorder %s522, %s538
      %p540 = scmp.eq.s32.totalorder %s34, 0
      %p541 = por %p539, %p540
      %s543 = sadd.s32 %s542, 1
      %p546 = scmp.eq.s32.totalorder %s28, 1
      %p547 = scmp.ne.s32.totalorder %s542, %s544
      %p548 = scmp.eq.s32.totalorder %s28, 0
      %p549 = por %p547, %p548
      %p550 = scmp.ne.s32.totalorder %s542, %s544
      %p551 = scmp.eq.s32.totalorder %s33, 1
      %p552 = por %p550, %p551
      %p553 = scmp.ne.s32.totalorder %s544, %s545
      %p554 = scmp.eq.s32.totalorder %s33, 0
      %p555 = por %p553, %p554
      %p556 = scmp.ne.s32.totalorder %s544, %s545
      %p557 = scmp.eq.s32.totalorder %s34, 1
      %p558 = por %p556, %p557
      %p560 = scmp.ne.s32.totalorder %s545, %s559
      %p561 = scmp.eq.s32.totalorder %s34, 0
      %p562 = por %p560, %p561
      %p563 = scmp.le.s32.totalorder 1, %s28
      %p564 = scmp.lt.s32.totalorder %s28, 3
      %p565 = pnand %p563, %p564
      %p566 = pneg %p565
      // Predicated region
      $region9: #{gps_node_forward.1} parent=5 // pred_check
        _
      $region10: #{gps_node_forward.1} parent=5 // pred_check_branch
        %568 = sbr.rel (%p565) target = $region12
      $region11: #{gps_node_forward.1} parent=5 // pred_region
        %s569 = ssub.s32 %s28, 1
        // Predicated region
        $region13: #{gps_node_forward.1} parent=11 // pred_check
          %p570 = pneg %p49
        $region14: #{gps_node_forward.1} parent=11 // pred_check_branch
          %572 = sbr.rel (%p570) target = $region16
        $region15: #{gps_node_forward.1} parent=11 // pred_region
          _
        $region16: #{gps_node_forward.1} parent=11 // pred_fallthru
          _
        // Predicated region
        $region17: #{gps_node_forward.1} parent=11 // pred_check
          %p573 = pneg %p70
        $region18: #{gps_node_forward.1} parent=11 // pred_check_branch
          %575 = sbr.rel (%p573) target = $region20
        $region19: #{gps_node_forward.1} parent=11 // pred_region
          _
        $region20: #{gps_node_forward.1} parent=11 // pred_fallthru
          _
        // Predicated region
        $region21: #{gps_node_forward.1} parent=11 // pred_check
          %p576 = pneg %p91
        $region22: #{gps_node_forward.1} parent=11 // pred_check_branch
          %578 = sbr.rel (%p576) target = $region24
        $region23: #{gps_node_forward.1} parent=11 // pred_region
          _
        $region24: #{gps_node_forward.1} parent=11 // pred_fallthru
          _
        // Predicated region
        $region25: #{gps_node_forward.1} parent=11 // pred_check
          %p579 = pneg %p112
        $region26: #{gps_node_forward.1} parent=11 // pred_check_branch
          %581 = sbr.rel (%p579) target = $region28
        $region27: #{gps_node_forward.1} parent=11 // pred_region
          %s583 = ssub.s32 32, 32
          %584 = vsyncadd [#allocation5], %s583
          %s586 = sshll.u32 %s3, 4
          %s587 = int_to_ptr.vmem [resolvable:$true] %s586
          %589 = dma.vmem_to_smem %s587, 32, [#allocation4], [#allocation5]
        $region28: #{gps_node_forward.1} parent=11 // pred_fallthru
          _
        // Predicated region
        $region29: #{gps_node_forward.1} parent=11 // pred_check
          %p590 = pneg %p133
        $region30: #{gps_node_forward.1} parent=11 // pred_check_branch
          %592 = sbr.rel (%p590) target = $region32
        $region31: #{gps_node_forward.1} parent=11 // pred_region
          _
        $region32: #{gps_node_forward.1} parent=11 // pred_fallthru
          _
        // Predicated region
        $region33: #{gps_node_forward.1} parent=11 // pred_check
          %p593 = pneg %p154
        $region34: #{gps_node_forward.1} parent=11 // pred_check_branch
          %595 = sbr.rel (%p593) target = $region36
        $region35: #{gps_node_forward.1} parent=11 // pred_region
          _
        $region36: #{gps_node_forward.1} parent=11 // pred_fallthru
          _
        // Predicated region
        $region37: #{gps_node_forward.1} parent=11 // pred_check
          %p596 = pneg %p175
        $region38: #{gps_node_forward.1} parent=11 // pred_check_branch
          %598 = sbr.rel (%p596) target = $region40
        $region39: #{gps_node_forward.1} parent=11 // pred_region
          _
        $region40: #{gps_node_forward.1} parent=11 // pred_fallthru
          _
        // Predicated region
        $region41: #{gps_node_forward.1} parent=11 // pred_check
          %p599 = pneg %p196
        $region42: #{gps_node_forward.1} parent=11 // pred_check_branch
          %601 = sbr.rel (%p599) target = $region44
        $region43: #{gps_node_forward.1} parent=11 // pred_region
          _
        $region44: #{gps_node_forward.1} parent=11 // pred_fallthru
          _
      $region12: #{gps_node_forward.1} parent=5 // pred_fallthru
        _
      %p602 = scmp.lt.s32.totalorder %s28, 2
      // Predicated region
      $region45: #{gps_node_forward.1} parent=5 // pred_check
        %p603 = pneg %p602
      $region46: #{gps_node_forward.1} parent=5 // pred_check_branch
        %605 = sbr.rel (%p603) target = $region48
      $region47: #{gps_node_forward.1} parent=5 // pred_region
        // Predicated region
        $region49: #{gps_node_forward.1} parent=47 // pred_check
          %p606 = pneg %p216
        $region50: #{gps_node_forward.1} parent=47 // pred_check_branch
          %608 = sbr.rel (%p606) target = $region52
        $region51: #{gps_node_forward.1} parent=47 // pred_region
          %p609 = scmp.lt.s32.totalorder %s28, 1
          %s610 = scalar_select %p609, %s28, 1
          %s611 = smul.addr %s610, 8
          %s612 = smul.addr %s611, 4
          %s613 = scalar_lea.vmem %s8, %s612
        $region52: #{gps_node_forward.1} parent=47 // pred_fallthru
          _
        // Predicated region
        $region53: #{gps_node_forward.1} parent=47 // pred_check
          %p614 = pneg %p242
        $region54: #{gps_node_forward.1} parent=47 // pred_check_branch
          %616 = sbr.rel (%p614) target = $region56
        $region55: #{gps_node_forward.1} parent=47 // pred_region
          %p617 = scmp.lt.s32.totalorder %s28, 1
          %s618 = scalar_select %p617, %s28, 1
          %s619 = scalar_lea.vmem %s9, %s618
        $region56: #{gps_node_forward.1} parent=47 // pred_fallthru
          _
        // Predicated region
        $region57: #{gps_node_forward.1} parent=47 // pred_check
          %p620 = pneg %p268
        $region58: #{gps_node_forward.1} parent=47 // pred_check_branch
          %622 = sbr.rel (%p620) target = $region60
        $region59: #{gps_node_forward.1} parent=47 // pred_region
          %p623 = scmp.lt.s32.totalorder %s28, 1
          %s624 = scalar_select %p623, %s28, 1
          %s625 = smul.addr %s624, 16
          %s626 = smul.addr %s625, 4
          %s627 = scalar_lea.vmem %s10, %s626
        $region60: #{gps_node_forward.1} parent=47 // pred_fallthru
          _
        // Predicated region
        $region61: #{gps_node_forward.1} parent=47 // pred_check
          %p628 = pneg %p294
        $region62: #{gps_node_forward.1} parent=47 // pred_check_branch
          %630 = sbr.rel (%p628) target = $region64
        $region63: #{gps_node_forward.1} parent=47 // pred_region
          %p631 = scmp.lt.s32.totalorder %s28, 1
          %s632 = scalar_select %p631, %s28, 1
          %s633 = smul.addr %s632, 2
          %s634 = scalar_lea.vmem %s11, %s633
        $region64: #{gps_node_forward.1} parent=47 // pred_fallthru
          _
        // Predicated region
        $region65: #{gps_node_forward.1} parent=47 // pred_check
          %p635 = pneg %p320
        $region66: #{gps_node_forward.1} parent=47 // pred_check_branch
          %637 = sbr.rel (%p635) target = $region68
        $region67: #{gps_node_forward.1} parent=47 // pred_region
          %p638 = scmp.lt.s32.totalorder %s28, 1
          %s639 = scalar_select %p638, %s28, 1
          %s640 = smul.addr %s639, 2
          %s641 = scalar_lea.vmem %s12, %s640
        $region68: #{gps_node_forward.1} parent=47 // pred_fallthru
          _
        // Predicated region
        $region69: #{gps_node_forward.1} parent=47 // pred_check
          %p642 = pneg %p346
        $region70: #{gps_node_forward.1} parent=47 // pred_check_branch
          %644 = sbr.rel (%p642) target = $region72
        $region71: #{gps_node_forward.1} parent=47 // pred_region
          %p645 = scmp.lt.s32.totalorder %s28, 1
          %s646 = scalar_select %p645, %s28, 1
          %s647 = scalar_lea.vmem %s13, %s646
        $region72: #{gps_node_forward.1} parent=47 // pred_fallthru
          _
        // Predicated region
        $region73: #{gps_node_forward.1} parent=47 // pred_check
          %p648 = pneg %p372
        $region74: #{gps_node_forward.1} parent=47 // pred_check_branch
          %650 = sbr.rel (%p648) target = $region76
        $region75: #{gps_node_forward.1} parent=47 // pred_region
          %p651 = scmp.lt.s32.totalorder %s28, 1
          %s652 = scalar_select %p651, %s28, 1
          %s653 = scalar_lea.vmem %s14, %s652
        $region76: #{gps_node_forward.1} parent=47 // pred_fallthru
          _
        // Predicated region
        $region77: #{gps_node_forward.1} parent=47 // pred_check
          %p654 = pneg %p398
        $region78: #{gps_node_forward.1} parent=47 // pred_check_branch
          %656 = sbr.rel (%p654) target = $region80
        $region79: #{gps_node_forward.1} parent=47 // pred_region
          %p657 = scmp.lt.s32.totalorder %s28, 1
          %s658 = scalar_select %p657, %s28, 1
          %s659 = smul.addr %s658, 8
          %s660 = smul.addr %s659, 4
          %s661 = scalar_lea.vmem %s15, %s660
        $region80: #{gps_node_forward.1} parent=47 // pred_fallthru
          _
        // Predicated region
        $region81: #{gps_node_forward.1} parent=47 // pred_check
          %p662 = pneg %p424
        $region82: #{gps_node_forward.1} parent=47 // pred_check_branch
          %664 = sbr.rel (%p662) target = $region84
        $region83: #{gps_node_forward.1} parent=47 // pred_region
          %p665 = scmp.lt.s32.totalorder %s28, 1
          %s666 = scalar_select %p665, %s28, 1
          %s667 = scalar_lea.vmem %s16, %s666
        $region84: #{gps_node_forward.1} parent=47 // pred_fallthru
          _
        // Predicated region
        $region85: #{gps_node_forward.1} parent=47 // pred_check
          %p668 = pneg %p450
        $region86: #{gps_node_forward.1} parent=47 // pred_check_branch
          %670 = sbr.rel (%p668) target = $region88
        $region87: #{gps_node_forward.1} parent=47 // pred_region
          %p671 = scmp.lt.s32.totalorder %s28, 1
          %s672 = scalar_select %p671, %s28, 1
          %s673 = smul.addr %s672, 16
          %s674 = smul.addr %s673, 4
          %s675 = scalar_lea.vmem %s17, %s674
        $region88: #{gps_node_forward.1} parent=47 // pred_fallthru
          _
        // Predicated region
        $region89: #{gps_node_forward.1} parent=47 // pred_check
          %p676 = pneg %p476
        $region90: #{gps_node_forward.1} parent=47 // pred_check_branch
          %678 = sbr.rel (%p676) target = $region92
        $region91: #{gps_node_forward.1} parent=47 // pred_region
          %p679 = scmp.lt.s32.totalorder %s28, 1
          %s680 = scalar_select %p679, %s28, 1
          %s681 = scalar_lea.vmem %s18, %s680
        $region92: #{gps_node_forward.1} parent=47 // pred_fallthru
          _
        // Predicated region
        $region93: #{gps_node_forward.1} parent=47 // pred_check
          %p682 = pneg %p502
        $region94: #{gps_node_forward.1} parent=47 // pred_check_branch
          %684 = sbr.rel (%p682) target = $region96
        $region95: #{gps_node_forward.1} parent=47 // pred_region
          %p685 = scmp.lt.s32.totalorder %s28, 1
          %s686 = scalar_select %p685, %s28, 1
          %s687 = scalar_lea.vmem %s19, %s686
        $region96: #{gps_node_forward.1} parent=47 // pred_fallthru
          _
        // Predicated region
        $region97: #{gps_node_forward.1} parent=47 // pred_check
          %p688 = pneg %p528
        $region98: #{gps_node_forward.1} parent=47 // pred_check_branch
          %690 = sbr.rel (%p688) target = $region100
        $region99: #{gps_node_forward.1} parent=47 // pred_region
          %p691 = scmp.lt.s32.totalorder %s28, 1
          %s692 = scalar_select %p691, %s28, 1
          %s693 = scalar_lea.vmem %s20, %s692
        $region100: #{gps_node_forward.1} parent=47 // pred_fallthru
          _
      $region48: #{gps_node_forward.1} parent=5 // pred_fallthru
        _
      %p694 = scmp.le.s32.totalorder 1, %s28
      %p695 = scmp.lt.s32.totalorder %s28, 3
      %p696 = pnand %p694, %p695
      %p697 = pneg %p696
      // Predicated region
      $region101: #{gps_node_forward.1} parent=5 // pred_check
        _
      $region102: #{gps_node_forward.1} parent=5 // pred_check_branch
        %699 = sbr.rel (%p696) target = $region104
      $region103: #{gps_node_forward.1} parent=5 // pred_region
        %s700 = ssub.s32 %s28, 1
        // Predicated region
        $region105: #{gps_node_forward.1} parent=103 // pred_check
          %p701 = pneg %p112
        $region106: #{gps_node_forward.1} parent=103 // pred_check_branch
          %703 = sbr.rel (%p701) target = $region108
        $region107: #{gps_node_forward.1} parent=103 // pred_region
          %704 = dma.done [#allocation5], 32
        $region108: #{gps_node_forward.1} parent=103 // pred_fallthru
          _
        %705 = sfence
        %p706 = pneg %p49
        %p707 = pneg %p46
        %p708 = pneg %p70
        %p709 = pneg %p67
        %p710 = pneg %p91
        %p711 = pneg %p88
        %p712 = pneg %p112
        %p713 = pneg %p109
        %p714 = pneg %p133
        %p715 = pneg %p130
        %p716 = pneg %p154
        %p717 = pneg %p151
        %p718 = pneg %p175
        %p719 = pneg %p172
        %p720 = pneg %p196
        %p721 = pneg %p193
        %p722 = scmp.lt.s32.totalorder %s33, 1
        %s723 = scalar_select %p722, %s33, 1
        %s724 = smul.addr %s723, 8
        %s725 = smul.addr %s724, 4
        %s726 = scalar_lea.vmem %s8, %s725
        %p727 = pneg %p222
        %p728 = pneg %p219
        %p729 = scmp.lt.s32.totalorder %s33, 1
        %s730 = scalar_select %p729, %s33, 1
        %s731 = scalar_lea.vmem %s9, %s730
        %p732 = pneg %p248
        %p733 = pneg %p245
        %p734 = scmp.lt.s32.totalorder %s33, 1
        %s735 = scalar_select %p734, %s33, 1
        %s736 = smul.addr %s735, 16
        %s737 = smul.addr %s736, 4
        %s738 = scalar_lea.vmem %s10, %s737
        %p739 = pneg %p274
        %p740 = pneg %p271
        %p741 = scmp.lt.s32.totalorder %s33, 1
        %s742 = scalar_select %p741, %s33, 1
        %s743 = smul.addr %s742, 2
        %s744 = scalar_lea.vmem %s11, %s743
        %p745 = pneg %p300
        %p746 = pneg %p297
        %p747 = scmp.lt.s32.totalorder %s33, 1
        %s748 = scalar_select %p747, %s33, 1
        %s749 = smul.addr %s748, 2
        %s750 = scalar_lea.vmem %s12, %s749
        %p751 = pneg %p326
        %p752 = pneg %p323
        %p753 = scmp.lt.s32.totalorder %s33, 1
        %s754 = scalar_select %p753, %s33, 1
        %s755 = scalar_lea.vmem %s13, %s754
        %p756 = pneg %p352
        %p757 = pneg %p349
        %p758 = scmp.lt.s32.totalorder %s33, 1
        %s759 = scalar_select %p758, %s33, 1
        %s760 = scalar_lea.vmem %s14, %s759
        %p761 = pneg %p378
        %p762 = pneg %p375
        %p763 = scmp.lt.s32.totalorder %s33, 1
        %s764 = scalar_select %p763, %s33, 1
        %s765 = smul.addr %s764, 8
        %s766 = smul.addr %s765, 4
        %s767 = scalar_lea.vmem %s15, %s766
        %p768 = pneg %p404
        %p769 = pneg %p401
        %p770 = scmp.lt.s32.totalorder %s33, 1
        %s771 = scalar_select %p770, %s33, 1
        %s772 = scalar_lea.vmem %s16, %s771
        %p773 = pneg %p430
        %p774 = pneg %p427
        %p775 = scmp.lt.s32.totalorder %s33, 1
        %s776 = scalar_select %p775, %s33, 1
        %s777 = smul.addr %s776, 16
        %s778 = smul.addr %s777, 4
        %s779 = scalar_lea.vmem %s17, %s778
        %p780 = pneg %p456
        %p781 = pneg %p453
        %p782 = scmp.lt.s32.totalorder %s33, 1
        %s783 = scalar_select %p782, %s33, 1
        %s784 = scalar_lea.vmem %s18, %s783
        %p785 = pneg %p482
        %p786 = pneg %p479
        %p787 = scmp.lt.s32.totalorder %s33, 1
        %s788 = scalar_select %p787, %s33, 1
        %s789 = scalar_lea.vmem %s19, %s788
        %p790 = pneg %p508
        %p791 = pneg %p505
        %p792 = scmp.lt.s32.totalorder %s33, 1
        %s793 = scalar_select %p792, %s33, 1
        %s794 = scalar_lea.vmem %s20, %s793
        %p795 = pneg %p534
        %p796 = pneg %p531
        %p797 = pneg %p555
        %p798 = pneg %p552
        %p799 = scmp.lt.s32.totalorder %s33, 1
        %s800 = scalar_select %p799, %s33, 1
        %s801 = smul.addr %s800, 8
        %s802 = smul.addr %s801, 4
        %s803 = scalar_lea.vmem %s8, %s802
        %p804 = scmp.lt.s32.totalorder %s33, 1
        %s805 = scalar_select %p804, %s33, 1
        %s806 = scalar_lea.vmem %s9, %s805
        %p807 = scmp.lt.s32.totalorder %s33, 1
        %s808 = scalar_select %p807, %s33, 1
        %s809 = smul.addr %s808, 16
        %s810 = smul.addr %s809, 4
        %s811 = scalar_lea.vmem %s10, %s810
        %p812 = scmp.lt.s32.totalorder %s33, 1
        %s813 = scalar_select %p812, %s33, 1
        %s814 = smul.addr %s813, 2
        %s815 = scalar_lea.vmem %s11, %s814
        %p816 = scmp.lt.s32.totalorder %s33, 1
        %s817 = scalar_select %p816, %s33, 1
        %s818 = smul.addr %s817, 2
        %s819 = scalar_lea.vmem %s12, %s818
        %p820 = scmp.lt.s32.totalorder %s33, 1
        %s821 = scalar_select %p820, %s33, 1
        %s822 = scalar_lea.vmem %s13, %s821
        %p823 = scmp.lt.s32.totalorder %s33, 1
        %s824 = scalar_select %p823, %s33, 1
        %s825 = scalar_lea.vmem %s14, %s824
        %p826 = scmp.lt.s32.totalorder %s33, 1
        %s827 = scalar_select %p826, %s33, 1
        %s828 = smul.addr %s827, 8
        %s829 = smul.addr %s828, 4
        %s830 = scalar_lea.vmem %s15, %s829
        %p831 = scmp.lt.s32.totalorder %s33, 1
        %s832 = scalar_select %p831, %s33, 1
        %s833 = scalar_lea.vmem %s16, %s832
        %p834 = scmp.lt.s32.totalorder %s33, 1
        %s835 = scalar_select %p834, %s33, 1
        %s836 = smul.addr %s835, 16
        %s837 = smul.addr %s836, 4
        %s838 = scalar_lea.vmem %s17, %s837
        %p839 = scmp.lt.s32.totalorder %s33, 1
        %s840 = scalar_select %p839, %s33, 1
        %s841 = scalar_lea.vmem %s18, %s840
        %p842 = scmp.lt.s32.totalorder %s33, 1
        %s843 = scalar_select %p842, %s33, 1
        %s844 = scalar_lea.vmem %s19, %s843
        %p845 = scmp.lt.s32.totalorder %s33, 1
        %s846 = scalar_select %p845, %s33, 1
        %s847 = scalar_lea.vmem %s20, %s846
        %p849 = scmp.eq.s32.totalorder %s33, 0
        // Predicated region
        $region109: #{gps_node_forward.1} parent=103 // pred_check
          %p850 = pneg %p849
        $region110: #{gps_node_forward.1} parent=103 // pred_check_branch
          %852 = sbr.rel (%p850) target = $region112
        $region111: #{gps_node_forward.1} parent=103 // pred_region
          %v853 = vld [vmem:[%s0] sm:$0xff]
          %v854 = vld [vmem:[%s0 + $0x8] sm:$0xff]
          %v855 = vpack.c.bf16 %v854, %v853
          %v856 = vld [vmem:[%s4] sm:$0xf]
          %v857 = vld [vmem:[%s5] sm:$0x1]
          %v859 = vlaneseq
          %v860 = vshrl.u32 %v859, 7
          %v861 = vsub.s32 0, %v860
          %v862 = vrot.slane %v857, %v861
          %vm864 = vcmask 64512
          %v866 = vsel %vm864, %v855, 0
          %vm868 = vcmask 1043456
          %v870 = vsel %vm868, %v856, 0
          %872 = vmatprep.subr.bf16.mxu0 0
          %873 = vmatpush1.bf16.msra.mxu0 %v870
          %874 = vmatprep.subr.bf16.mxu0 0
          %875 = vmatpush1.bf16.msra.mxu0 0
          %876 = vmatprep.subr.bf16.mxu0 0
          %877 = vmatpush1.bf16.msra.mxu0 0
          %878 = vmatprep.subr.bf16.mxu0 0
          %879 = vmatpush1.bf16.msra.mxu0 0
          %880 = vmatprep.subr.bf16.mxu0 0
          %881 = vmatpush1.bf16.msra.mxu0 0
          %882 = vmatprep.subr.bf16.mxu0 0
          %883 = vmatpush1.bf16.msra.mxu0 0
          %884 = vmatprep.subr.bf16.mxu0 0
          %885 = vmatpush1.bf16.msra.mxu0 0
          %886 = vmatprep.subr.bf16.mxu0 0
          %887 = vmatpush1.bf16.msra.mxu0 0
          %888 = vmatprep.subr.bf16.mxu0 0
          %889 = vmatpush1.bf16.msra.mxu0 0
          %890 = vmatprep.subr.bf16.mxu0 0
          %891 = vmatpush1.bf16.msra.mxu0 0
          %892 = vmatprep.subr.bf16.mxu0 0
          %893 = vmatpush1.bf16.msra.mxu0 0
          %894 = vmatprep.subr.bf16.mxu0 0
          %895 = vmatpush1.bf16.msra.mxu0 0
          %896 = vmatprep.subr.bf16.mxu0 0
          %897 = vmatpush1.bf16.msra.mxu0 0
          %898 = vmatprep.subr.bf16.mxu0 0
          %899 = vmatpush1.bf16.msra.mxu0 0
          %900 = vmatprep.subr.bf16.mxu0 0
          %901 = vmatpush1.bf16.msra.mxu0 0
          %902 = vmatprep.subr.bf16.mxu0 0
          %903 = vmatpush1.bf16.msra.mxu0 0
          %904 = vmatprep.mubr.bf16.mxu0 0
          %905 = vmatmul.mubr.bf16.gmra.mrb[0].mxu0 %v866
          %v906 = vpop.f32.mrb[0].mxu0
          %v907 = vadd.f32 %v862, %v906
          %v908 = vpop.f32.mrb[0].mxu0
          %v909 = vpop.f32.mrb[0].mxu0
          %v910 = vadd.f32 %v862, %v909
          %v911 = vpop.f32.mrb[0].mxu0
          %912 = vdwg.mxu0
          %vm913 = vcmask 523264
          %914 = vst.msk [vmem:[#allocation2] sm:$0xff] %vm913, %v907
          %915 = vst.msk [vmem:[#allocation2 + $0x8] sm:$0xff] %vm913, %v910
        $region112: #{gps_node_forward.1} parent=103 // pred_fallthru
          _
        %v916 = vld [vmem:[#allocation2] sm:$0xff]
        %v917 = vld [vmem:[#allocation2 + $0x8] sm:$0xff]
        %v918 = vpack.c.bf16 %v917, %v916
        %v919 = vld [vmem:[%s803] sm:$0xf]
        %v920 = vld [vmem:[%s803 + $0x4] sm:$0xf]
        %v921 = vld [vmem:[%s803 + $0x8] sm:$0xf]
        %v922 = vld [vmem:[%s803 + $0xc] sm:$0xf]
        %v923 = vld [vmem:[%s803 + $0x10] sm:$0xf]
        %v924 = vld [vmem:[%s803 + $0x14] sm:$0xf]
        %v925 = vld [vmem:[%s803 + $0x18] sm:$0xf]
        %v926 = vld [vmem:[%s803 + $0x1c] sm:$0xf]
        %v935 = vunpack.c.l.b16 %v919
        %v936 = vunpack.c.l.b16 %v920
        %v937 = vunpack.c.l.b16 %v921
        %v938 = vunpack.c.l.b16 %v922
        %v939 = vunpack.c.l.b16 %v923
        %v940 = vunpack.c.l.b16 %v924
        %v941 = vunpack.c.l.b16 %v925
        %v942 = vunpack.c.l.b16 %v926
        %v943 = vpack.c.b16 %v936, %v935
        %v944 = vpack.c.b16 %v938, %v937
        %v945 = vpack.c.b16 %v940, %v939
        %v946 = vpack.c.b16 %v942, %v941
        %vm951 = vcmask 523264
        %v953 = vsel %vm951, %v918, 0
        %955 = vmatprep.subr.bf16.mxu0 0
        %956 = vmatpush1.bf16.msra.mxu0 %v943
        %957 = vmatprep.subr.bf16.mxu0 0
        %958 = vmatpush1.bf16.msra.mxu0 %v944
        %959 = vmatprep.subr.bf16.mxu0 0
        %960 = vmatpush1.bf16.msra.mxu0 %v945
        %961 = vmatprep.subr.bf16.mxu0 0
        %962 = vmatpush1.bf16.msra.mxu0 %v946
        %963 = vmatprep.subr.bf16.mxu0 0
        %964 = vmatpush1.bf16.msra.mxu0 0
        %965 = vmatprep.subr.bf16.mxu0 0
        %966 = vmatpush1.bf16.msra.mxu0 0
        %967 = vmatprep.subr.bf16.mxu0 0
        %968 = vmatpush1.bf16.msra.mxu0 0
        %969 = vmatprep.subr.bf16.mxu0 0
        %970 = vmatpush1.bf16.msra.mxu0 0
        %971 = vmatprep.subr.bf16.mxu0 0
        %972 = vmatpush1.bf16.msra.mxu0 0
        %973 = vmatprep.subr.bf16.mxu0 0
        %974 = vmatpush1.bf16.msra.mxu0 0
        %975 = vmatprep.subr.bf16.mxu0 0
        %976 = vmatpush1.bf16.msra.mxu0 0
        %977 = vmatprep.subr.bf16.mxu0 0
        %978 = vmatpush1.bf16.msra.mxu0 0
        %979 = vmatprep.subr.bf16.mxu0 0
        %980 = vmatpush1.bf16.msra.mxu0 0
        %981 = vmatprep.subr.bf16.mxu0 0
        %982 = vmatpush1.bf16.msra.mxu0 0
        %983 = vmatprep.subr.bf16.mxu0 0
        %984 = vmatpush1.bf16.msra.mxu0 0
        %985 = vmatprep.subr.bf16.mxu0 0
        %986 = vmatpush1.bf16.msra.mxu0 0
        %987 = vmatprep.mubr.bf16.mxu0 0
        %988 = vmatmul.mubr.bf16.gmra.mrb[0].mxu0 %v953
        %v989 = vpop.f32.mrb[0].mxu0
        %v990 = vadd.f32 0.0, %v989
        %v991 = vpop.f32.mrb[0].mxu0
        %v992 = vpop.f32.mrb[0].mxu0
        %v993 = vadd.f32 0.0, %v992
        %v994 = vpop.f32.mrb[0].mxu0
        %995 = vdwg.mxu0
        %v996 = vld [vmem:[%s2] sm:$0xf]
        %v997 = vld [vmem:[%s2 + $0x4] sm:$0xf]
        %v998 = vpack.c.bf16 %v993, %v990
        %v999 = vld [vmem:[%s806] sm:$0x1]
        %v1001 = vlaneseq
        %v1002 = vshrl.u32 %v1001, 7
        %v1003 = vsub.s32 0, %v1002
        %v1004 = vrot.slane %v999, %v1003
        %v1008 = vunpack.c.l.b16 %v996
        %v1009 = vunpack.c.l.b16 %v997
        %v1010 = vpack.c.b16 %v1009, %v1008
        %vm1011 = vcmask 130048
        %v1013 = vsel %vm1011, %v1010, 0
        %1015 = vmatprep.subr.bf16.mxu0 0
        %1016 = vmatpush1.bf16.msra.mxu0 %v998
        %1017 = vmatprep.subr.bf16.mxu0 0
        %1018 = vmatpush1.bf16.msra.mxu0 0
        %1019 = vmatprep.subr.bf16.mxu0 0
        %1020 = vmatpush1.bf16.msra.mxu0 0
        %1021 = vmatprep.subr.bf16.mxu0 0
        %1022 = vmatpush1.bf16.msra.mxu0 0
        %1023 = vmatprep.subr.bf16.mxu0 0
        %1024 = vmatpush1.bf16.msra.mxu0 0
        %1025 = vmatprep.subr.bf16.mxu0 0
        %1026 = vmatpush1.bf16.msra.mxu0 0
        %1027 = vmatprep.subr.bf16.mxu0 0
        %1028 = vmatpush1.bf16.msra.mxu0 0
        %1029 = vmatprep.subr.bf16.mxu0 0
        %1030 = vmatpush1.bf16.msra.mxu0 0
        %1031 = vmatprep.subr.bf16.mxu0 0
        %1032 = vmatpush1.bf16.msra.mxu0 0
        %1033 = vmatprep.subr.bf16.mxu0 0
        %1034 = vmatpush1.bf16.msra.mxu0 0
        %1035 = vmatprep.subr.bf16.mxu0 0
        %1036 = vmatpush1.bf16.msra.mxu0 0
        %1037 = vmatprep.subr.bf16.mxu0 0
        %1038 = vmatpush1.bf16.msra.mxu0 0
        %1039 = vmatprep.subr.bf16.mxu0 0
        %1040 = vmatpush1.bf16.msra.mxu0 0
        %1041 = vmatprep.subr.bf16.mxu0 0
        %1042 = vmatpush1.bf16.msra.mxu0 0
        %1043 = vmatprep.subr.bf16.mxu0 0
        %1044 = vmatpush1.bf16.msra.mxu0 0
        %1045 = vmatprep.subr.bf16.mxu0 0
        %1046 = vmatpush1.bf16.msra.mxu0 0
        %1047 = vmatprep.mubr.bf16.mxu0 0
        %1048 = vmatmul.mubr.bf16.gmra.mrb[0].mxu0 %v1013
        %v1049 = vpop.f32.mrb[0].mxu0
        %v1050 = vadd.f32 %v1004, %v1049
        %v1051 = vpop.f32.mrb[0].mxu0
        %v1052 = vpop.f32.mrb[0].mxu0
        %v1053 = vadd.f32 %v1004, %v1052
        %v1054 = vpop.f32.mrb[0].mxu0
        %1055 = vdwg.mxu0
        %v1056 = vld [vmem:[%s811] sm:$0xff]
        %v1057 = vld [vmem:[%s811 + $0x8] sm:$0xff]
        %v1058 = vld [vmem:[%s811 + $0x10] sm:$0xff]
        %v1059 = vld [vmem:[%s811 + $0x18] sm:$0xff]
        %v1060 = vld [vmem:[%s811 + $0x20] sm:$0xff]
        %v1061 = vld [vmem:[%s811 + $0x28] sm:$0xff]
        %v1062 = vld [vmem:[%s811 + $0x30] sm:$0xff]
        %v1063 = vld [vmem:[%s811 + $0x38] sm:$0xff]
        %v1064 = vld [vmem:[%s815] sm:$0x3]
        %v1066 = vlaneseq
        %v1067 = vshrl.u32 %v1066, 7
        %v1068 = vsub.s32 0, %v1067
        %v1069 = vrot.slane %v1064, %v1068
        %v1070 = vlaneseq
        %v1071 = vshrl.u32 %v1070, 7
        %v1072 = vsub.s32 1, %v1071
        %v1073 = vrot.slane %v1064, %v1072
        %v1084 = vunpack.c.l.b16 %v1056
        %v1085 = vunpack.c.h.b16 %v1056
        %v1086 = vunpack.c.l.b16 %v1057
        %v1087 = vunpack.c.h.b16 %v1057
        %v1088 = vunpack.c.l.b16 %v1058
        %v1089 = vunpack.c.h.b16 %v1058
        %v1090 = vunpack.c.l.b16 %v1059
        %v1091 = vunpack.c.h.b16 %v1059
        %v1092 = vunpack.c.l.b16 %v1060
        %v1093 = vunpack.c.h.b16 %v1060
        %v1094 = vunpack.c.l.b16 %v1061
        %v1095 = vunpack.c.h.b16 %v1061
        %v1096 = vunpack.c.l.b16 %v1062
        %v1097 = vunpack.c.h.b16 %v1062
        %v1098 = vunpack.c.l.b16 %v1063
        %v1099 = vunpack.c.h.b16 %v1063
        %v1100 = vpack.c.b16 %v1086, %v1084
        %v1101 = vpack.c.b16 %v1087, %v1085
        %v1102 = vpack.c.b16 %v1090, %v1088
        %v1103 = vpack.c.b16 %v1091, %v1089
        %v1104 = vpack.c.b16 %v1094, %v1092
        %v1105 = vpack.c.b16 %v1095, %v1093
        %v1106 = vpack.c.b16 %v1098, %v1096
        %v1107 = vpack.c.b16 %v1099, %v1097
        %1116 = vmatprep.subr.bf16.mxu0 %v1101
        %1117 = vmatpush1.bf16.msra.mxu0 %v1100
        %1118 = vmatprep.subr.bf16.mxu0 %v1103
        %1119 = vmatpush1.bf16.msra.mxu0 %v1102
        %1120 = vmatprep.subr.bf16.mxu0 %v1105
        %1121 = vmatpush1.bf16.msra.mxu0 %v1104
        %1122 = vmatprep.subr.bf16.mxu0 %v1107
        %1123 = vmatpush1.bf16.msra.mxu0 %v1106
        %1124 = vmatprep.subr.bf16.mxu0 0
        %1125 = vmatpush1.bf16.msra.mxu0 0
        %1126 = vmatprep.subr.bf16.mxu0 0
        %1127 = vmatpush1.bf16.msra.mxu0 0
        %1128 = vmatprep.subr.bf16.mxu0 0
        %1129 = vmatpush1.bf16.msra.mxu0 0
        %1130 = vmatprep.subr.bf16.mxu0 0
        %1131 = vmatpush1.bf16.msra.mxu0 0
        %1132 = vmatprep.subr.bf16.mxu0 0
        %1133 = vmatpush1.bf16.msra.mxu0 0
        %1134 = vmatprep.subr.bf16.mxu0 0
        %1135 = vmatpush1.bf16.msra.mxu0 0
        %1136 = vmatprep.subr.bf16.mxu0 0
        %1137 = vmatpush1.bf16.msra.mxu0 0
        %1138 = vmatprep.subr.bf16.mxu0 0
        %1139 = vmatpush1.bf16.msra.mxu0 0
        %1140 = vmatprep.subr.bf16.mxu0 0
        %1141 = vmatpush1.bf16.msra.mxu0 0
        %1142 = vmatprep.subr.bf16.mxu0 0
        %1143 = vmatpush1.bf16.msra.mxu0 0
        %1144 = vmatprep.subr.bf16.mxu0 0
        %1145 = vmatpush1.bf16.msra.mxu0 0
        %1146 = vmatprep.subr.bf16.mxu0 0
        %1147 = vmatpush1.bf16.msra.mxu0 0
        %1148 = vmatprep.mubr.bf16.mxu0 0
        %1149 = vmatmul.mubr.bf16.gmra.mrb[0].mxu0 %v953
        %v1150 = vpop.f32.mrb[0].mxu0
        %v1151 = vadd.f32 %v1069, %v1150
        %v1152 = vpop.f32.mrb[0].mxu0
        %v1153 = vadd.f32 %v1073, %v1152
        %v1154 = vpop.f32.mrb[0].mxu0
        %v1155 = vadd.f32 %v1069, %v1154
        %v1156 = vpop.f32.mrb[0].mxu0
        %v1157 = vadd.f32 %v1073, %v1156
        %1158 = vdwg.mxu0
        %v1159 = vld [vmem:[%s1] sm:$0xff]
        %v1160 = vld [vmem:[%s1 + $0x8] sm:$0xff]
        %vm1161 = vcmp.gt.f32.partialorder %v1159, 0.0
        %vm1162 = vcmp.gt.f32.partialorder %v1160, 0.0
        %v1163 = vpack.c.bf16 %v1155, %v1151
        %v1164 = vpack.c.bf16 %v1157, %v1153
        %1166 = vrot.lane.b32.xlu0 %v1163, 64
        %v1167 = vpop.permute.xlu0 %1166
        %v1169 = vsel %vm1011, %v1163, 0
        %v1172 = vsel %vm1011, %v1167, 0
        %1174 = vmatprep.subr.bf16.mxu0 0
        %1175 = vmatpush1.bf16.xpose.msra.mxu0 %v1172
        %1176 = vmatprep.subr.bf16.mxu0 0
        %1177 = vmatpush1.bf16.xpose.msra.mxu0 0
        %1178 = vmatprep.subr.bf16.mxu0 0
        %1179 = vmatpush1.bf16.xpose.msra.mxu0 0
        %1180 = vmatprep.subr.bf16.mxu0 0
        %1181 = vmatpush1.bf16.xpose.msra.mxu0 0
        %1182 = vmatprep.subr.bf16.mxu0 0
        %1183 = vmatpush1.bf16.xpose.msra.mxu0 0
        %1184 = vmatprep.subr.bf16.mxu0 0
        %1185 = vmatpush1.bf16.xpose.msra.mxu0 0
        %1186 = vmatprep.subr.bf16.mxu0 0
        %1187 = vmatpush1.bf16.xpose.msra.mxu0 0
        %1188 = vmatprep.subr.bf16.mxu0 0
        %1189 = vmatpush1.bf16.xpose.msra.mxu0 0
        %1190 = vmatprep.subr.bf16.mxu0 0
        %1191 = vmatpush1.bf16.xpose.msra.mxu0 0
        %1192 = vmatprep.subr.bf16.mxu0 0
        %1193 = vmatpush1.bf16.xpose.msra.mxu0 0
        %1194 = vmatprep.subr.bf16.mxu0 0
        %1195 = vmatpush1.bf16.xpose.msra.mxu0 0
        %1196 = vmatprep.subr.bf16.mxu0 0
        %1197 = vmatpush1.bf16.xpose.msra.mxu0 0
        %1198 = vmatprep.subr.bf16.mxu0 0
        %1199 = vmatpush1.bf16.xpose.msra.mxu0 0
        %1200 = vmatprep.subr.bf16.mxu0 0
        %1201 = vmatpush1.bf16.xpose.msra.mxu0 0
        %1202 = vmatprep.subr.bf16.mxu0 0
        %1203 = vmatpush1.bf16.xpose.msra.mxu0 0
        %1204 = vmatprep.subr.bf16.mxu0 0
        %1205 = vmatpush1.bf16.xpose.msra.mxu0 0
        %1206 = vmatprep.mubr.bf16.mxu0 0
        %1207 = vmatmul.mubr.bf16.gmra.mrb[0].mxu0 %v1169
        %v1208 = vpop.f32.mrb[0].mxu0
        %v1209 = vadd.f32 0.0, %v1208
        %v1210 = vpop.f32.mrb[0].mxu0
        %v1211 = vpop.f32.mrb[0].mxu0
        %v1212 = vadd.f32 0.0, %v1211
        %v1213 = vpop.f32.mrb[0].mxu0
        %1214 = vdwg.mxu0
        %v1215 = vsel %vm1161, %v1209, -1e+30
        %v1216 = vsel %vm1162, %v1212, -1e+30
        %v1217 = vsel %vm1011, %v1215, -inf
        %1218 = vmax.xlane.f32.xlu0 %v1217
        %v1219 = vpop.xlane.xlu0 %1218
        %v1220 = vsel %vm1011, %v1216, -inf
        %1221 = vmax.xlane.f32.xlu0 %v1220
        %v1222 = vpop.xlane.xlu0 %1221
        %v1223 = vsub.f32 %v1215, %v1219
        %v1224 = vsub.f32 %v1216, %v1222
        %v1225 = vmul.f32 %v1223, 1.442695
        %v1226 = vpow.pop %v1225
        %v1227 = vmul.f32 %v1224, 1.442695
        %v1228 = vpow.pop %v1227
        %v1229 = vmul.f32 %v1159, %v1226
        %v1230 = vmul.f32 %v1160, %v1228
        %v1231 = vsel %vm1011, %v1229, 0.0
        %1232 = vadd.xlane.f32.xlu0 %v1231
        %v1233 = vpop.xlane.xlu0 %1232
        %v1234 = vsel %vm1011, %v1230, 0.0
        %1235 = vadd.xlane.f32.xlu0 %v1234
        %v1236 = vpop.xlane.xlu0 %1235
        %vm1237 = vcmp.gt.f32.partialorder %v1233, 0.0
        %vm1238 = vcmp.gt.f32.partialorder %v1236, 0.0
        %v1239 = vrcp.pop %v1233
        %v1240 = vrcp.pop %v1236
        %v1241 = vsel %vm1237, %v1239, 0.0
        %v1242 = vsel %vm1238, %v1240, 0.0
        %v1243 = vmul.f32 %v1229, %v1241
        %v1244 = vmul.f32 %v1230, %v1242
        %v1245 = vpack.c.bf16 %v1244, %v1243
        %v1247 = vsel %vm1011, %v1245, 0
        %1249 = vmatprep.subr.bf16.mxu0 0
        %1250 = vmatpush1.bf16.msra.mxu0 %v1164
        %1251 = vmatprep.subr.bf16.mxu0 0
        %1252 = vmatpush1.bf16.msra.mxu0 0
        %1253 = vmatprep.subr.bf16.mxu0 0
        %1254 = vmatpush1.bf16.msra.mxu0 0
        %1255 = vmatprep.subr.bf16.mxu0 0
        %1256 = vmatpush1.bf16.msra.mxu0 0
        %1257 = vmatprep.subr.bf16.mxu0 0
        %1258 = vmatpush1.bf16.msra.mxu0 0
        %1259 = vmatprep.subr.bf16.mxu0 0
        %1260 = vmatpush1.bf16.msra.mxu0 0
        %1261 = vmatprep.subr.bf16.mxu0 0
        %1262 = vmatpush1.bf16.msra.mxu0 0
        %1263 = vmatprep.subr.bf16.mxu0 0
        %1264 = vmatpush1.bf16.msra.mxu0 0
        %1265 = vmatprep.subr.bf16.mxu0 0
        %1266 = vmatpush1.bf16.msra.mxu0 0
        %1267 = vmatprep.subr.bf16.mxu0 0
        %1268 = vmatpush1.bf16.msra.mxu0 0
        %1269 = vmatprep.subr.bf16.mxu0 0
        %1270 = vmatpush1.bf16.msra.mxu0 0
        %1271 = vmatprep.subr.bf16.mxu0 0
        %1272 = vmatpush1.bf16.msra.mxu0 0
        %1273 = vmatprep.subr.bf16.mxu0 0
        %1274 = vmatpush1.bf16.msra.mxu0 0
        %1275 = vmatprep.subr.bf16.mxu0 0
        %1276 = vmatpush1.bf16.msra.mxu0 0
        %1277 = vmatprep.subr.bf16.mxu0 0
        %1278 = vmatpush1.bf16.msra.mxu0 0
        %1279 = vmatprep.subr.bf16.mxu0 0
        %1280 = vmatpush1.bf16.msra.mxu0 0
        %1281 = vmatprep.mubr.bf16.mxu0 0
        %1282 = vmatmul.mubr.bf16.gmra.mrb[0].mxu0 %v1247
        %v1283 = vpop.f32.mrb[0].mxu0
        %v1284 = vadd.f32 0.0, %v1283
        %v1285 = vpop.f32.mrb[0].mxu0
        %v1286 = vpop.f32.mrb[0].mxu0
        %v1287 = vadd.f32 0.0, %v1286
        %v1288 = vpop.f32.mrb[0].mxu0
        %1289 = vdwg.mxu0
        %1290 = vst.msk [vmem:[#allocation3] sm:$0xff] %vm1011, %v1284
        %1291 = vst.msk [vmem:[#allocation3 + $0x8] sm:$0xff] %vm1011, %v1287
        %1292 = vrot.lane.b32.xlu0 %v1163, 112
        %v1293 = vpop.permute.xlu0 %1292
        %1294 = vrot.lane.b32.xlu0 %v1163, 48
        %v1295 = vpop.permute.xlu0 %1294
        %v1297 = vsel %vm1011, %v1293, 0
        %v1300 = vsel %vm1011, %v1295, 0
        %1302 = vmatprep.subr.bf16.mxu0 0
        %1303 = vmatpush1.bf16.xpose.msra.mxu0 %v1300
        %1304 = vmatprep.subr.bf16.mxu0 0
        %1305 = vmatpush1.bf16.xpose.msra.mxu0 0
        %1306 = vmatprep.subr.bf16.mxu0 0
        %1307 = vmatpush1.bf16.xpose.msra.mxu0 0
        %1308 = vmatprep.subr.bf16.mxu0 0
        %1309 = vmatpush1.bf16.xpose.msra.mxu0 0
        %1310 = vmatprep.subr.bf16.mxu0 0
        %1311 = vmatpush1.bf16.xpose.msra.mxu0 0
        %1312 = vmatprep.subr.bf16.mxu0 0
        %1313 = vmatpush1.bf16.xpose.msra.mxu0 0
        %1314 = vmatprep.subr.bf16.mxu0 0
        %1315 = vmatpush1.bf16.xpose.msra.mxu0 0
        %1316 = vmatprep.subr.bf16.mxu0 0
        %1317 = vmatpush1.bf16.xpose.msra.mxu0 0
        %1318 = vmatprep.subr.bf16.mxu0 0
        %1319 = vmatpush1.bf16.xpose.msra.mxu0 0
        %1320 = vmatprep.subr.bf16.mxu0 0
        %1321 = vmatpush1.bf16.xpose.msra.mxu0 0
        %1322 = vmatprep.subr.bf16.mxu0 0
        %1323 = vmatpush1.bf16.xpose.msra.mxu0 0
        %1324 = vmatprep.subr.bf16.mxu0 0
        %1325 = vmatpush1.bf16.xpose.msra.mxu0 0
        %1326 = vmatprep.subr.bf16.mxu0 0
        %1327 = vmatpush1.bf16.xpose.msra.mxu0 0
        %1328 = vmatprep.subr.bf16.mxu0 0
        %1329 = vmatpush1.bf16.xpose.msra.mxu0 0
        %1330 = vmatprep.subr.bf16.mxu0 0
        %1331 = vmatpush1.bf16.xpose.msra.mxu0 0
        %1332 = vmatprep.subr.bf16.mxu0 0
        %1333 = vmatpush1.bf16.xpose.msra.mxu0 0
        %1334 = vmatprep.mubr.bf16.mxu0 0
        %1335 = vmatmul.mubr.bf16.gmra.mrb[0].mxu0 %v1297
        %v1336 = vpop.f32.mrb[0].mxu0
        %v1337 = vadd.f32 0.0, %v1336
        %v1338 = vpop.f32.mrb[0].mxu0
        %v1339 = vpop.f32.mrb[0].mxu0
        %v1340 = vadd.f32 0.0, %v1339
        %v1341 = vpop.f32.mrb[0].mxu0
        %1342 = vdwg.mxu0
        %v1343 = vsel %vm1161, %v1337, -1e+30
        %v1344 = vsel %vm1162, %v1340, -1e+30
        %v1345 = vsel %vm1011, %v1343, -inf
        %1346 = vmax.xlane.f32.xlu0 %v1345
        %v1347 = vpop.xlane.xlu0 %1346
        %v1348 = vsel %vm1011, %v1344, -inf
        %1349 = vmax.xlane.f32.xlu0 %v1348
        %v1350 = vpop.xlane.xlu0 %1349
        %v1351 = vsub.f32 %v1343, %v1347
        %v1352 = vsub.f32 %v1344, %v1350
        %v1353 = vmul.f32 %v1351, 1.442695
        %v1354 = vpow.pop %v1353
        %v1355 = vmul.f32 %v1352, 1.442695
        %v1356 = vpow.pop %v1355
        %v1357 = vmul.f32 %v1159, %v1354
        %v1358 = vmul.f32 %v1160, %v1356
        %v1359 = vsel %vm1011, %v1357, 0.0
        %1360 = vadd.xlane.f32.xlu0 %v1359
        %v1361 = vpop.xlane.xlu0 %1360
        %v1362 = vsel %vm1011, %v1358, 0.0
        %1363 = vadd.xlane.f32.xlu0 %v1362
        %v1364 = vpop.xlane.xlu0 %1363
        %vm1365 = vcmp.gt.f32.partialorder %v1361, 0.0
        %vm1366 = vcmp.gt.f32.partialorder %v1364, 0.0
        %v1367 = vrcp.pop %v1361
        %v1368 = vrcp.pop %v1364
        %v1369 = vsel %vm1365, %v1367, 0.0
        %v1370 = vsel %vm1366, %v1368, 0.0
        %v1371 = vmul.f32 %v1357, %v1369
        %v1372 = vmul.f32 %v1358, %v1370
        %v1373 = vpack.c.bf16 %v1372, %v1371
        %1375 = vrot.lane.b32.xlu0 %v1164, 112
        %v1376 = vpop.permute.xlu0 %1375
        %v1379 = vsel %vm1011, %v1373, 0
        %1381 = vmatprep.subr.bf16.mxu0 0
        %1382 = vmatpush1.bf16.msra.mxu0 %v1376
        %1383 = vmatprep.subr.bf16.mxu0 0
        %1384 = vmatpush1.bf16.msra.mxu0 0
        %1385 = vmatprep.subr.bf16.mxu0 0
        %1386 = vmatpush1.bf16.msra.mxu0 0
        %1387 = vmatprep.subr.bf16.mxu0 0
        %1388 = vmatpush1.bf16.msra.mxu0 0
        %1389 = vmatprep.subr.bf16.mxu0 0
        %1390 = vmatpush1.bf16.msra.mxu0 0
        %1391 = vmatprep.subr.bf16.mxu0 0
        %1392 = vmatpush1.bf16.msra.mxu0 0
        %1393 = vmatprep.subr.bf16.mxu0 0
        %1394 = vmatpush1.bf16.msra.mxu0 0
        %1395 = vmatprep.subr.bf16.mxu0 0
        %1396 = vmatpush1.bf16.msra.mxu0 0
        %1397 = vmatprep.subr.bf16.mxu0 0
        %1398 = vmatpush1.bf16.msra.mxu0 0
        %1399 = vmatprep.subr.bf16.mxu0 0
        %1400 = vmatpush1.bf16.msra.mxu0 0
        %1401 = vmatprep.subr.bf16.mxu0 0
        %1402 = vmatpush1.bf16.msra.mxu0 0
        %1403 = vmatprep.subr.bf16.mxu0 0
        %1404 = vmatpush1.bf16.msra.mxu0 0
        %1405 = vmatprep.subr.bf16.mxu0 0
        %1406 = vmatpush1.bf16.msra.mxu0 0
        %1407 = vmatprep.subr.bf16.mxu0 0
        %1408 = vmatpush1.bf16.msra.mxu0 0
        %1409 = vmatprep.subr.bf16.mxu0 0
        %1410 = vmatpush1.bf16.msra.mxu0 0
        %1411 = vmatprep.subr.bf16.mxu0 0
        %1412 = vmatpush1.bf16.msra.mxu0 0
        %1413 = vmatprep.mubr.bf16.mxu0 0
        %1414 = vmatmul.mubr.bf16.gmra.mrb[0].mxu0 %v1379
        %v1415 = vpop.f32.mrb[0].mxu0
        %v1416 = vadd.f32 0.0, %v1415
        %v1417 = vpop.f32.mrb[0].mxu0
        %v1418 = vpop.f32.mrb[0].mxu0
        %v1419 = vadd.f32 0.0, %v1418
        %v1420 = vpop.f32.mrb[0].mxu0
        %1421 = vdwg.mxu0
        %1424 = vrot.lane.b32.xlu0 %v1416, 16
        %v1425 = vpop.permute.xlu0 %1424
        %1426 = vrot.lane.b32.xlu0 %v1419, 16
        %v1427 = vpop.permute.xlu0 %1426
        %vm1430 = vcmask 261248
        %1431 = vst.msk [vmem:[#allocation3] sm:$0xff] %vm1430, %v1425
        %1432 = vst.msk [vmem:[#allocation3 + $0x8] sm:$0xff] %vm1430, %v1427
        %1433 = vrot.lane.b32.xlu0 %v1163, 96
        %v1434 = vpop.permute.xlu0 %1433
        %1435 = vrot.lane.b32.xlu0 %v1163, 32
        %v1436 = vpop.permute.xlu0 %1435
        %v1438 = vsel %vm1011, %v1434, 0
        %v1441 = vsel %vm1011, %v1436, 0
        %1443 = vmatprep.subr.bf16.mxu0 0
        %1444 = vmatpush1.bf16.xpose.msra.mxu0 %v1441
        %1445 = vmatprep.subr.bf16.mxu0 0
        %1446 = vmatpush1.bf16.xpose.msra.mxu0 0
        %1447 = vmatprep.subr.bf16.mxu0 0
        %1448 = vmatpush1.bf16.xpose.msra.mxu0 0
        %1449 = vmatprep.subr.bf16.mxu0 0
        %1450 = vmatpush1.bf16.xpose.msra.mxu0 0
        %1451 = vmatprep.subr.bf16.mxu0 0
        %1452 = vmatpush1.bf16.xpose.msra.mxu0 0
        %1453 = vmatprep.subr.bf16.mxu0 0
        %1454 = vmatpush1.bf16.xpose.msra.mxu0 0
        %1455 = vmatprep.subr.bf16.mxu0 0
        %1456 = vmatpush1.bf16.xpose.msra.mxu0 0
        %1457 = vmatprep.subr.bf16.mxu0 0
        %1458 = vmatpush1.bf16.xpose.msra.mxu0 0
        %1459 = vmatprep.subr.bf16.mxu0 0
        %1460 = vmatpush1.bf16.xpose.msra.mxu0 0
        %1461 = vmatprep.subr.bf16.mxu0 0
        %1462 = vmatpush1.bf16.xpose.msra.mxu0 0
        %1463 = vmatprep.subr.bf16.mxu0 0
        %1464 = vmatpush1.bf16.xpose.msra.mxu0 0
        %1465 = vmatprep.subr.bf16.mxu0 0
        %1466 = vmatpush1.bf16.xpose.msra.mxu0 0
        %1467 = vmatprep.subr.bf16.mxu0 0
        %1468 = vmatpush1.bf16.xpose.msra.mxu0 0
        %1469 = vmatprep.subr.bf16.mxu0 0
        %1470 = vmatpush1.bf16.xpose.msra.mxu0 0
        %1471 = vmatprep.subr.bf16.mxu0 0
        %1472 = vmatpush1.bf16.xpose.msra.mxu0 0
        %1473 = vmatprep.subr.bf16.mxu0 0
        %1474 = vmatpush1.bf16.xpose.msra.mxu0 0
        %1475 = vmatprep.mubr.bf16.mxu0 0
        %1476 = vmatmul.mubr.bf16.gmra.mrb[0].mxu0 %v1438
        %v1477 = vpop.f32.mrb[0].mxu0
        %v1478 = vadd.f32 0.0, %v1477
        %v1479 = vpop.f32.mrb[0].mxu0
        %v1480 = vpop.f32.mrb[0].mxu0
        %v1481 = vadd.f32 0.0, %v1480
        %v1482 = vpop.f32.mrb[0].mxu0
        %1483 = vdwg.mxu0
        %v1484 = vsel %vm1161, %v1478, -1e+30
        %v1485 = vsel %vm1162, %v1481, -1e+30
        %v1486 = vsel %vm1011, %v1484, -inf
        %1487 = vmax.xlane.f32.xlu0 %v1486
        %v1488 = vpop.xlane.xlu0 %1487
        %v1489 = vsel %vm1011, %v1485, -inf
        %1490 = vmax.xlane.f32.xlu0 %v1489
        %v1491 = vpop.xlane.xlu0 %1490
        %v1492 = vsub.f32 %v1484, %v1488
        %v1493 = vsub.f32 %v1485, %v1491
        %v1494 = vmul.f32 %v1492, 1.442695
        %v1495 = vpow.pop %v1494
        %v1496 = vmul.f32 %v1493, 1.442695
        %v1497 = vpow.pop %v1496
        %v1498 = vmul.f32 %v1159, %v1495
        %v1499 = vmul.f32 %v1160, %v1497
        %v1500 = vsel %vm1011, %v1498, 0.0
        %1501 = vadd.xlane.f32.xlu0 %v1500
        %v1502 = vpop.xlane.xlu0 %1501
        %v1503 = vsel %vm1011, %v1499, 0.0
        %1504 = vadd.xlane.f32.xlu0 %v1503
        %v1505 = vpop.xlane.xlu0 %1504
        %vm1506 = vcmp.gt.f32.partialorder %v1502, 0.0
        %vm1507 = vcmp.gt.f32.partialorder %v1505, 0.0
        %v1508 = vrcp.pop %v1502
        %v1509 = vrcp.pop %v1505
        %v1510 = vsel %vm1506, %v1508, 0.0
        %v1511 = vsel %vm1507, %v1509, 0.0
        %v1512 = vmul.f32 %v1498, %v1510
        %v1513 = vmul.f32 %v1499, %v1511
        %v1514 = vpack.c.bf16 %v1513, %v1512
        %1515 = vrot.lane.b32.xlu0 %v1164, 96
        %v1516 = vpop.permute.xlu0 %1515
        %v1519 = vsel %vm1011, %v1514, 0
        %1521 = vmatprep.subr.bf16.mxu0 0
        %1522 = vmatpush1.bf16.msra.mxu0 %v1516
        %1523 = vmatprep.subr.bf16.mxu0 0
        %1524 = vmatpush1.bf16.msra.mxu0 0
        %1525 = vmatprep.subr.bf16.mxu0 0
        %1526 = vmatpush1.bf16.msra.mxu0 0
        %1527 = vmatprep.subr.bf16.mxu0 0
        %1528 = vmatpush1.bf16.msra.mxu0 0
        %1529 = vmatprep.subr.bf16.mxu0 0
        %1530 = vmatpush1.bf16.msra.mxu0 0
        %1531 = vmatprep.subr.bf16.mxu0 0
        %1532 = vmatpush1.bf16.msra.mxu0 0
        %1533 = vmatprep.subr.bf16.mxu0 0
        %1534 = vmatpush1.bf16.msra.mxu0 0
        %1535 = vmatprep.subr.bf16.mxu0 0
        %1536 = vmatpush1.bf16.msra.mxu0 0
        %1537 = vmatprep.subr.bf16.mxu0 0
        %1538 = vmatpush1.bf16.msra.mxu0 0
        %1539 = vmatprep.subr.bf16.mxu0 0
        %1540 = vmatpush1.bf16.msra.mxu0 0
        %1541 = vmatprep.subr.bf16.mxu0 0
        %1542 = vmatpush1.bf16.msra.mxu0 0
        %1543 = vmatprep.subr.bf16.mxu0 0
        %1544 = vmatpush1.bf16.msra.mxu0 0
        %1545 = vmatprep.subr.bf16.mxu0 0
        %1546 = vmatpush1.bf16.msra.mxu0 0
        %1547 = vmatprep.subr.bf16.mxu0 0
        %1548 = vmatpush1.bf16.msra.mxu0 0
        %1549 = vmatprep.subr.bf16.mxu0 0
        %1550 = vmatpush1.bf16.msra.mxu0 0
        %1551 = vmatprep.subr.bf16.mxu0 0
        %1552 = vmatpush1.bf16.msra.mxu0 0
        %1553 = vmatprep.mubr.bf16.mxu0 0
        %1554 = vmatmul.mubr.bf16.gmra.mrb[0].mxu0 %v1519
        %v1555 = vpop.f32.mrb[0].mxu0
        %v1556 = vadd.f32 0.0, %v1555
        %v1557 = vpop.f32.mrb[0].mxu0
        %v1558 = vpop.f32.mrb[0].mxu0
        %v1559 = vadd.f32 0.0, %v1558
        %v1560 = vpop.f32.mrb[0].mxu0
        %1561 = vdwg.mxu0
        %1564 = vrot.lane.b32.xlu0 %v1556, 32
        %v1565 = vpop.permute.xlu0 %1564
        %1566 = vrot.lane.b32.xlu0 %v1559, 32
        %v1567 = vpop.permute.xlu0 %1566
        %vm1570 = vcmask 392448
        %1571 = vst.msk [vmem:[#allocation3] sm:$0xff] %vm1570, %v1565
        %1572 = vst.msk [vmem:[#allocation3 + $0x8] sm:$0xff] %vm1570, %v1567
        %1573 = vrot.lane.b32.xlu0 %v1163, 80
        %v1574 = vpop.permute.xlu0 %1573
        %1575 = vrot.lane.b32.xlu0 %v1163, 16
        %v1576 = vpop.permute.xlu0 %1575
        %v1578 = vsel %vm1011, %v1574, 0
        %v1581 = vsel %vm1011, %v1576, 0
        %1583 = vmatprep.subr.bf16.mxu0 0
        %1584 = vmatpush1.bf16.xpose.msra.mxu0 %v1581
        %1585 = vmatprep.subr.bf16.mxu0 0
        %1586 = vmatpush1.bf16.xpose.msra.mxu0 0
        %1587 = vmatprep.subr.bf16.mxu0 0
        %1588 = vmatpush1.bf16.xpose.msra.mxu0 0
        %1589 = vmatprep.subr.bf16.mxu0 0
        %1590 = vmatpush1.bf16.xpose.msra.mxu0 0
        %1591 = vmatprep.subr.bf16.mxu0 0
        %1592 = vmatpush1.bf16.xpose.msra.mxu0 0
        %1593 = vmatprep.subr.bf16.mxu0 0
        %1594 = vmatpush1.bf16.xpose.msra.mxu0 0
        %1595 = vmatprep.subr.bf16.mxu0 0
        %1596 = vmatpush1.bf16.xpose.msra.mxu0 0
        %1597 = vmatprep.subr.bf16.mxu0 0
        %1598 = vmatpush1.bf16.xpose.msra.mxu0 0
        %1599 = vmatprep.subr.bf16.mxu0 0
        %1600 = vmatpush1.bf16.xpose.msra.mxu0 0
        %1601 = vmatprep.subr.bf16.mxu0 0
        %1602 = vmatpush1.bf16.xpose.msra.mxu0 0
        %1603 = vmatprep.subr.bf16.mxu0 0
        %1604 = vmatpush1.bf16.xpose.msra.mxu0 0
        %1605 = vmatprep.subr.bf16.mxu0 0
        %1606 = vmatpush1.bf16.xpose.msra.mxu0 0
        %1607 = vmatprep.subr.bf16.mxu0 0
        %1608 = vmatpush1.bf16.xpose.msra.mxu0 0
        %1609 = vmatprep.subr.bf16.mxu0 0
        %1610 = vmatpush1.bf16.xpose.msra.mxu0 0
        %1611 = vmatprep.subr.bf16.mxu0 0
        %1612 = vmatpush1.bf16.xpose.msra.mxu0 0
        %1613 = vmatprep.subr.bf16.mxu0 0
        %1614 = vmatpush1.bf16.xpose.msra.mxu0 0
        %1615 = vmatprep.mubr.bf16.mxu0 0
        %1616 = vmatmul.mubr.bf16.gmra.mrb[0].mxu0 %v1578
        %v1617 = vpop.f32.mrb[0].mxu0
        %v1618 = vadd.f32 0.0, %v1617
        %v1619 = vpop.f32.mrb[0].mxu0
        %v1620 = vpop.f32.mrb[0].mxu0
        %v1621 = vadd.f32 0.0, %v1620
        %v1622 = vpop.f32.mrb[0].mxu0
        %1623 = vdwg.mxu0
        %v1624 = vsel %vm1161, %v1618, -1e+30
        %v1625 = vsel %vm1162, %v1621, -1e+30
        %v1626 = vsel %vm1011, %v1624, -inf
        %1627 = vmax.xlane.f32.xlu0 %v1626
        %v1628 = vpop.xlane.xlu0 %1627
        %v1629 = vsel %vm1011, %v1625, -inf
        %1630 = vmax.xlane.f32.xlu0 %v1629
        %v1631 = vpop.xlane.xlu0 %1630
        %v1632 = vsub.f32 %v1624, %v1628
        %v1633 = vsub.f32 %v1625, %v1631
        %v1634 = vmul.f32 %v1632, 1.442695
        %v1635 = vpow.pop %v1634
        %v1636 = vmul.f32 %v1633, 1.442695
        %v1637 = vpow.pop %v1636
        %v1638 = vmul.f32 %v1159, %v1635
        %v1639 = vmul.f32 %v1160, %v1637
        %v1640 = vsel %vm1011, %v1638, 0.0
        %1641 = vadd.xlane.f32.xlu0 %v1640
        %v1642 = vpop.xlane.xlu0 %1641
        %v1643 = vsel %vm1011, %v1639, 0.0
        %1644 = vadd.xlane.f32.xlu0 %v1643
        %v1645 = vpop.xlane.xlu0 %1644
        %vm1646 = vcmp.gt.f32.partialorder %v1642, 0.0
        %vm1647 = vcmp.gt.f32.partialorder %v1645, 0.0
        %v1648 = vrcp.pop %v1642
        %v1649 = vrcp.pop %v1645
        %v1650 = vsel %vm1646, %v1648, 0.0
        %v1651 = vsel %vm1647, %v1649, 0.0
        %v1652 = vmul.f32 %v1638, %v1650
        %v1653 = vmul.f32 %v1639, %v1651
        %v1654 = vpack.c.bf16 %v1653, %v1652
        %1655 = vrot.lane.b32.xlu0 %v1164, 80
        %v1656 = vpop.permute.xlu0 %1655
        %v1659 = vsel %vm1011, %v1654, 0
        %1661 = vmatprep.subr.bf16.mxu0 0
        %1662 = vmatpush1.bf16.msra.mxu0 %v1656
        %1663 = vmatprep.subr.bf16.mxu0 0
        %1664 = vmatpush1.bf16.msra.mxu0 0
        %1665 = vmatprep.subr.bf16.mxu0 0
        %1666 = vmatpush1.bf16.msra.mxu0 0
        %1667 = vmatprep.subr.bf16.mxu0 0
        %1668 = vmatpush1.bf16.msra.mxu0 0
        %1669 = vmatprep.subr.bf16.mxu0 0
        %1670 = vmatpush1.bf16.msra.mxu0 0
        %1671 = vmatprep.subr.bf16.mxu0 0
        %1672 = vmatpush1.bf16.msra.mxu0 0
        %1673 = vmatprep.subr.bf16.mxu0 0
        %1674 = vmatpush1.bf16.msra.mxu0 0
        %1675 = vmatprep.subr.bf16.mxu0 0
        %1676 = vmatpush1.bf16.msra.mxu0 0
        %1677 = vmatprep.subr.bf16.mxu0 0
        %1678 = vmatpush1.bf16.msra.mxu0 0
        %1679 = vmatprep.subr.bf16.mxu0 0
        %1680 = vmatpush1.bf16.msra.mxu0 0
        %1681 = vmatprep.subr.bf16.mxu0 0
        %1682 = vmatpush1.bf16.msra.mxu0 0
        %1683 = vmatprep.subr.bf16.mxu0 0
        %1684 = vmatpush1.bf16.msra.mxu0 0
        %1685 = vmatprep.subr.bf16.mxu0 0
        %1686 = vmatpush1.bf16.msra.mxu0 0
        %1687 = vmatprep.subr.bf16.mxu0 0
        %1688 = vmatpush1.bf16.msra.mxu0 0
        %1689 = vmatprep.subr.bf16.mxu0 0
        %1690 = vmatpush1.bf16.msra.mxu0 0
        %1691 = vmatprep.subr.bf16.mxu0 0
        %1692 = vmatpush1.bf16.msra.mxu0 0
        %1693 = vmatprep.mubr.bf16.mxu0 0
        %1694 = vmatmul.mubr.bf16.gmra.mrb[0].mxu0 %v1659
        %v1695 = vpop.f32.mrb[0].mxu0
        %v1696 = vadd.f32 0.0, %v1695
        %v1697 = vpop.f32.mrb[0].mxu0
        %v1698 = vpop.f32.mrb[0].mxu0
        %v1699 = vadd.f32 0.0, %v1698
        %v1700 = vpop.f32.mrb[0].mxu0
        %1701 = vdwg.mxu0
        %1704 = vrot.lane.b32.xlu0 %v1696, 48
        %v1705 = vpop.permute.xlu0 %1704
        %1706 = vrot.lane.b32.xlu0 %v1699, 48
        %v1707 = vpop.permute.xlu0 %1706
        %vm1710 = vcmask 523648
        %1711 = vst.msk [vmem:[#allocation3] sm:$0xff] %vm1710, %v1705
        %1712 = vst.msk [vmem:[#allocation3 + $0x8] sm:$0xff] %vm1710, %v1707
        %v1713 = vld [vmem:[#allocation3] sm:$0xff]
        %v1714 = vld [vmem:[#allocation3 + $0x8] sm:$0xff]
        %v1715 = vld [vmem:[%s819] sm:$0x3]
        %v1716 = vlaneseq
        %v1717 = vshrl.u32 %v1716, 7
        %v1718 = vsub.s32 0, %v1717
        %v1719 = vrot.slane %v1715, %v1718
        %v1720 = vmul.f32 %v1713, %v1719
        %v1721 = vmul.f32 %v1714, %v1719
        %v1722 = vlaneseq
        %v1723 = vshrl.u32 %v1722, 7
        %v1724 = vsub.s32 1, %v1723
        %v1725 = vrot.slane %v1715, %v1724
        %1727 = vrot.lane.b32.xlu0 %v1725, 64
        %v1728 = vpop.permute.xlu0 %1727
        %v1730 = vmul.f32 %v1153, %v1728
        %v1731 = vmul.f32 %v1157, %v1728
        %1734 = vrot.lane.b32.xlu0 %v1730, 64
        %v1735 = vpop.permute.xlu0 %1734
        %1736 = vrot.lane.b32.xlu0 %v1731, 64
        %v1737 = vpop.permute.xlu0 %1736
        %v1740 = vadd.f32 %v1720, %v1735
        %v1741 = vadd.f32 %v1721, %v1737
        %v1742 = vsel %vm951, %v1740, 0.0
        %1743 = vadd.xlane.f32.xlu0 %v1742
        %v1744 = vpop.xlane.xlu0 %1743
        %v1745 = vsel %vm951, %v1741, 0.0
        %1746 = vadd.xlane.f32.xlu0 %v1745
        %v1747 = vpop.xlane.xlu0 %1746
        %v1748 = vxor.u32 %v1744, 2147483648
        %v1749 = vxor.u32 %v1747, 2147483648
        %v1750 = vmul.f32 %v1748, 1.442695
        %v1751 = vpow.pop %v1750
        %v1752 = vmul.f32 %v1749, 1.442695
        %v1753 = vpow.pop %v1752
        %v1754 = vadd.f32 %v1751, 1.0
        %v1755 = vadd.f32 %v1753, 1.0
        %v1756 = vrcp.pop %v1754
        %v1757 = vmul.f32 1.0, %v1756
        %v1758 = vrcp.pop %v1755
        %v1759 = vmul.f32 1.0, %v1758
        %v1760 = vmul.f32 %v1757, %v1153
        %v1761 = vmul.f32 %v1759, %v1157
        %v1762 = vsub.f32 1.0, %v1757
        %v1763 = vsub.f32 1.0, %v1759
        %v1764 = vmul.f32 %v1762, %v1713
        %v1765 = vmul.f32 %v1763, %v1714
        %1768 = vrot.lane.b32.xlu0 %v1764, 64
        %v1769 = vpop.permute.xlu0 %1768
        %1770 = vrot.lane.b32.xlu0 %v1765, 64
        %v1771 = vpop.permute.xlu0 %1770
        %v1774 = vadd.f32 %v1760, %v1769
        %v1775 = vadd.f32 %v1761, %v1771
        %s1776 = smul.u32 %s33, 128
        %s1777 = sld [smem:[#allocation4 + %s1776]]
        %v1778 = vstv %s1777
        %v1779 = vmul.f32 %v1778, %v1050
        %v1780 = vmul.f32 %v1778, %v1053
        %s1781 = sadd.s32 %s1776, 1
        %s1782 = sld [smem:[#allocation4 + %s1781]]
        %v1783 = vstv %s1782
        %v1784 = vmul.f32 %v1783, %v1774
        %v1785 = vmul.f32 %v1783, %v1775
        %1788 = vrot.lane.b32.xlu0 %v1784, 64
        %v1789 = vpop.permute.xlu0 %1788
        %1790 = vrot.lane.b32.xlu0 %v1785, 64
        %v1791 = vpop.permute.xlu0 %1790
        %v1794 = vadd.f32 %v1779, %v1789
        %v1795 = vadd.f32 %v1780, %v1791
        %v1796 = vld [vmem:[%s822] sm:$0x1]
        %v1797 = vld [vmem:[%s825] sm:$0x1]
        %v1798 = vsel %vm951, %v1794, 0.0
        %1799 = vadd.xlane.f32.xlu0 %v1798
        %v1800 = vpop.xlane.xlu0 %1799
        %v1801 = vsel %vm951, %v1795, 0.0
        %1802 = vadd.xlane.f32.xlu0 %v1801
        %v1803 = vpop.xlane.xlu0 %1802
        %v1804 = vrcp.pop 64.0
        %v1805 = vmul.f32 %v1800, %v1804
        %v1806 = vmul.f32 %v1803, %v1804
        %v1807 = vsub.f32 %v1794, %v1805
        %v1808 = vsub.f32 %v1795, %v1806
        %v1809 = vmul.f32 %v1807, %v1807
        %v1810 = vmul.f32 %v1808, %v1808
        %v1811 = vsel %vm951, %v1809, 0.0
        %1812 = vadd.xlane.f32.xlu0 %v1811
        %v1813 = vpop.xlane.xlu0 %1812
        %v1814 = vsel %vm951, %v1810, 0.0
        %1815 = vadd.xlane.f32.xlu0 %v1814
        %v1816 = vpop.xlane.xlu0 %1815
        %v1817 = vmul.f32 %v1813, %v1804
        %v1818 = vmul.f32 %v1816, %v1804
        %v1819 = vadd.f32 %v1817, 1e-05
        %v1820 = vadd.f32 %v1818, 1e-05
        %v1821 = vrsqrt.pop %v1819
        %v1822 = vrsqrt.pop %v1820
        %v1823 = vmul.f32 %v1807, %v1821
        %v1824 = vmul.f32 %v1808, %v1822
        %v1826 = vlaneseq
        %v1827 = vshrl.u32 %v1826, 7
        %v1828 = vsub.s32 0, %v1827
        %v1829 = vrot.slane %v1796, %v1828
        %v1831 = vmul.f32 %v1823, %v1829
        %v1832 = vmul.f32 %v1824, %v1829
        %v1834 = vlaneseq
        %v1835 = vshrl.u32 %v1834, 7
        %v1836 = vsub.s32 0, %v1835
        %v1837 = vrot.slane %v1797, %v1836
        %v1839 = vadd.f32 %v1831, %v1837
        %v1840 = vadd.f32 %v1832, %v1837
        %v1841 = vpack.c.bf16 %v1840, %v1839
        %v1842 = vld [vmem:[%s830] sm:$0xf]
        %v1843 = vld [vmem:[%s830 + $0x4] sm:$0xf]
        %v1844 = vld [vmem:[%s830 + $0x8] sm:$0xf]
        %v1845 = vld [vmem:[%s830 + $0xc] sm:$0xf]
        %v1846 = vld [vmem:[%s830 + $0x10] sm:$0xf]
        %v1847 = vld [vmem:[%s830 + $0x14] sm:$0xf]
        %v1848 = vld [vmem:[%s830 + $0x18] sm:$0xf]
        %v1849 = vld [vmem:[%s830 + $0x1c] sm:$0xf]
        %v1850 = vld [vmem:[%s833] sm:$0x1]
        %v1852 = vlaneseq
        %v1853 = vshrl.u32 %v1852, 7
        %v1854 = vsub.s32 0, %v1853
        %v1855 = vrot.slane %v1850, %v1854
        %v1865 = vunpack.c.l.b16 %v1842
        %v1866 = vunpack.c.l.b16 %v1843
        %v1867 = vunpack.c.l.b16 %v1844
        %v1868 = vunpack.c.l.b16 %v1845
        %v1869 = vunpack.c.l.b16 %v1846
        %v1870 = vunpack.c.l.b16 %v1847
        %v1871 = vunpack.c.l.b16 %v1848
        %v1872 = vunpack.c.l.b16 %v1849
        %v1873 = vpack.c.b16 %v1866, %v1865
        %v1874 = vpack.c.b16 %v1868, %v1867
        %v1875 = vpack.c.b16 %v1870, %v1869
        %v1876 = vpack.c.b16 %v1872, %v1871
        %v1882 = vsel %vm951, %v1841, 0
        %1884 = vmatprep.subr.bf16.mxu0 0
        %1885 = vmatpush1.bf16.msra.mxu0 %v1873
        %1886 = vmatprep.subr.bf16.mxu0 0
        %1887 = vmatpush1.bf16.msra.mxu0 %v1874
        %1888 = vmatprep.subr.bf16.mxu0 0
        %1889 = vmatpush1.bf16.msra.mxu0 %v1875
        %1890 = vmatprep.subr.bf16.mxu0 0
        %1891 = vmatpush1.bf16.msra.mxu0 %v1876
        %1892 = vmatprep.subr.bf16.mxu0 0
        %1893 = vmatpush1.bf16.msra.mxu0 0
        %1894 = vmatprep.subr.bf16.mxu0 0
        %1895 = vmatpush1.bf16.msra.mxu0 0
        %1896 = vmatprep.subr.bf16.mxu0 0
        %1897 = vmatpush1.bf16.msra.mxu0 0
        %1898 = vmatprep.subr.bf16.mxu0 0
        %1899 = vmatpush1.bf16.msra.mxu0 0
        %1900 = vmatprep.subr.bf16.mxu0 0
        %1901 = vmatpush1.bf16.msra.mxu0 0
        %1902 = vmatprep.subr.bf16.mxu0 0
        %1903 = vmatpush1.bf16.msra.mxu0 0
        %1904 = vmatprep.subr.bf16.mxu0 0
        %1905 = vmatpush1.bf16.msra.mxu0 0
        %1906 = vmatprep.subr.bf16.mxu0 0
        %1907 = vmatpush1.bf16.msra.mxu0 0
        %1908 = vmatprep.subr.bf16.mxu0 0
        %1909 = vmatpush1.bf16.msra.mxu0 0
        %1910 = vmatprep.subr.bf16.mxu0 0
        %1911 = vmatpush1.bf16.msra.mxu0 0
        %1912 = vmatprep.subr.bf16.mxu0 0
        %1913 = vmatpush1.bf16.msra.mxu0 0
        %1914 = vmatprep.subr.bf16.mxu0 0
        %1915 = vmatpush1.bf16.msra.mxu0 0
        %1916 = vmatprep.mubr.bf16.mxu0 0
        %1917 = vmatmul.mubr.bf16.gmra.mrb[0].mxu0 %v1882
        %v1918 = vpop.f32.mrb[0].mxu0
        %v1919 = vadd.f32 %v1855, %v1918
        %v1920 = vpop.f32.mrb[0].mxu0
        %v1921 = vpop.f32.mrb[0].mxu0
        %v1922 = vadd.f32 %v1855, %v1921
        %v1923 = vpop.f32.mrb[0].mxu0
        %1924 = vdwg.mxu0
        %v1925 = vmax.f32 %v1919, 0.0
        %v1926 = vmax.f32 %v1922, 0.0
        %v1927 = vpack.c.bf16 %v1926, %v1925
        %v1928 = vld [vmem:[%s838] sm:$0xf]
        %v1929 = vld [vmem:[%s838 + $0x4] sm:$0xf]
        %v1930 = vld [vmem:[%s838 + $0x8] sm:$0xf]
        %v1931 = vld [vmem:[%s838 + $0xc] sm:$0xf]
        %v1932 = vld [vmem:[%s838 + $0x10] sm:$0xf]
        %v1933 = vld [vmem:[%s838 + $0x14] sm:$0xf]
        %v1934 = vld [vmem:[%s838 + $0x18] sm:$0xf]
        %v1935 = vld [vmem:[%s838 + $0x1c] sm:$0xf]
        %v1936 = vld [vmem:[%s838 + $0x20] sm:$0xf]
        %v1937 = vld [vmem:[%s838 + $0x24] sm:$0xf]
        %v1938 = vld [vmem:[%s838 + $0x28] sm:$0xf]
        %v1939 = vld [vmem:[%s838 + $0x2c] sm:$0xf]
        %v1940 = vld [vmem:[%s838 + $0x30] sm:$0xf]
        %v1941 = vld [vmem:[%s838 + $0x34] sm:$0xf]
        %v1942 = vld [vmem:[%s838 + $0x38] sm:$0xf]
        %v1943 = vld [vmem:[%s838 + $0x3c] sm:$0xf]
        %v1944 = vld [vmem:[%s841] sm:$0x1]
        %v1946 = vlaneseq
        %v1947 = vshrl.u32 %v1946, 7
        %v1948 = vsub.s32 0, %v1947
        %v1949 = vrot.slane %v1944, %v1948
        %v1967 = vunpack.c.l.b16 %v1928
        %v1968 = vunpack.c.l.b16 %v1929
        %v1969 = vunpack.c.l.b16 %v1930
        %v1970 = vunpack.c.l.b16 %v1931
        %v1971 = vunpack.c.l.b16 %v1932
        %v1972 = vunpack.c.l.b16 %v1933
        %v1973 = vunpack.c.l.b16 %v1934
        %v1974 = vunpack.c.l.b16 %v1935
        %v1975 = vunpack.c.l.b16 %v1936
        %v1976 = vunpack.c.l.b16 %v1937
        %v1977 = vunpack.c.l.b16 %v1938
        %v1978 = vunpack.c.l.b16 %v1939
        %v1979 = vunpack.c.l.b16 %v1940
        %v1980 = vunpack.c.l.b16 %v1941
        %v1981 = vunpack.c.l.b16 %v1942
        %v1982 = vunpack.c.l.b16 %v1943
        %v1983 = vpack.c.b16 %v1968, %v1967
        %v1984 = vpack.c.b16 %v1970, %v1969
        %v1985 = vpack.c.b16 %v1972, %v1971
        %v1986 = vpack.c.b16 %v1974, %v1973
        %v1987 = vpack.c.b16 %v1976, %v1975
        %v1988 = vpack.c.b16 %v1978, %v1977
        %v1989 = vpack.c.b16 %v1980, %v1979
        %v1990 = vpack.c.b16 %v1982, %v1981
        %1999 = vmatprep.subr.bf16.mxu0 0
        %2000 = vmatpush1.bf16.msra.mxu0 %v1983
        %2001 = vmatprep.subr.bf16.mxu0 0
        %2002 = vmatpush1.bf16.msra.mxu0 %v1984
        %2003 = vmatprep.subr.bf16.mxu0 0
        %2004 = vmatpush1.bf16.msra.mxu0 %v1985
        %2005 = vmatprep.subr.bf16.mxu0 0
        %2006 = vmatpush1.bf16.msra.mxu0 %v1986
        %2007 = vmatprep.subr.bf16.mxu0 0
        %2008 = vmatpush1.bf16.msra.mxu0 %v1987
        %2009 = vmatprep.subr.bf16.mxu0 0
        %2010 = vmatpush1.bf16.msra.mxu0 %v1988
        %2011 = vmatprep.subr.bf16.mxu0 0
        %2012 = vmatpush1.bf16.msra.mxu0 %v1989
        %2013 = vmatprep.subr.bf16.mxu0 0
        %2014 = vmatpush1.bf16.msra.mxu0 %v1990
        %2015 = vmatprep.subr.bf16.mxu0 0
        %2016 = vmatpush1.bf16.msra.mxu0 0
        %2017 = vmatprep.subr.bf16.mxu0 0
        %2018 = vmatpush1.bf16.msra.mxu0 0
        %2019 = vmatprep.subr.bf16.mxu0 0
        %2020 = vmatpush1.bf16.msra.mxu0 0
        %2021 = vmatprep.subr.bf16.mxu0 0
        %2022 = vmatpush1.bf16.msra.mxu0 0
        %2023 = vmatprep.subr.bf16.mxu0 0
        %2024 = vmatpush1.bf16.msra.mxu0 0
        %2025 = vmatprep.subr.bf16.mxu0 0
        %2026 = vmatpush1.bf16.msra.mxu0 0
        %2027 = vmatprep.subr.bf16.mxu0 0
        %2028 = vmatpush1.bf16.msra.mxu0 0
        %2029 = vmatprep.subr.bf16.mxu0 0
        %2030 = vmatpush1.bf16.msra.mxu0 0
        %2031 = vmatprep.mubr.bf16.mxu0 0
        %2032 = vmatmul.mubr.bf16.gmra.mrb[0].mxu0 %v1927
        %v2033 = vpop.f32.mrb[0].mxu0
        %v2034 = vadd.f32 %v1949, %v2033
        %v2035 = vpop.f32.mrb[0].mxu0
        %v2036 = vpop.f32.mrb[0].mxu0
        %v2037 = vadd.f32 %v1949, %v2036
        %v2038 = vpop.f32.mrb[0].mxu0
        %2039 = vdwg.mxu0
        %v2040 = vadd.f32 %v2034, %v1839
        %v2041 = vadd.f32 %v2037, %v1840
        %v2042 = vld [vmem:[%s844] sm:$0x1]
        %v2043 = vld [vmem:[%s847] sm:$0x1]
        %v2044 = vsel %vm951, %v2040, 0.0
        %2045 = vadd.xlane.f32.xlu0 %v2044
        %v2046 = vpop.xlane.xlu0 %2045
        %v2047 = vsel %vm951, %v2041, 0.0
        %2048 = vadd.xlane.f32.xlu0 %v2047
        %v2049 = vpop.xlane.xlu0 %2048
        %v2050 = vmul.f32 %v2046, %v1804
        %v2051 = vmul.f32 %v2049, %v1804
        %v2052 = vsub.f32 %v2040, %v2050
        %v2053 = vsub.f32 %v2041, %v2051
        %v2054 = vmul.f32 %v2052, %v2052
        %v2055 = vmul.f32 %v2053, %v2053
        %v2056 = vsel %vm951, %v2054, 0.0
        %2057 = vadd.xlane.f32.xlu0 %v2056
        %v2058 = vpop.xlane.xlu0 %2057
        %v2059 = vsel %vm951, %v2055, 0.0
        %2060 = vadd.xlane.f32.xlu0 %v2059
        %v2061 = vpop.xlane.xlu0 %2060
        %v2062 = vmul.f32 %v2058, %v1804
        %v2063 = vmul.f32 %v2061, %v1804
        %v2064 = vadd.f32 %v2062, 1e-05
        %v2065 = vadd.f32 %v2063, 1e-05
        %v2066 = vrsqrt.pop %v2064
        %v2067 = vrsqrt.pop %v2065
        %v2068 = vmul.f32 %v2052, %v2066
        %v2069 = vmul.f32 %v2053, %v2067
        %v2071 = vlaneseq
        %v2072 = vshrl.u32 %v2071, 7
        %v2073 = vsub.s32 0, %v2072
        %v2074 = vrot.slane %v2042, %v2073
        %v2076 = vmul.f32 %v2068, %v2074
        %v2077 = vmul.f32 %v2069, %v2074
        %v2079 = vlaneseq
        %v2080 = vshrl.u32 %v2079, 7
        %v2081 = vsub.s32 0, %v2080
        %v2082 = vrot.slane %v2043, %v2081
        %v2084 = vadd.f32 %v2076, %v2082
        %v2085 = vadd.f32 %v2077, %v2082
        %2086 = vst.msk [vmem:[#allocation2] sm:$0xff] %vm951, %v2084
        %2087 = vst.msk [vmem:[#allocation2 + $0x8] sm:$0xff] %vm951, %v2085
        %p2088 = scmp.eq.s32.totalorder %s33, 1
        // Predicated region
        $region113: #{gps_node_forward.1} parent=103 // pred_check
          %p2089 = pneg %p2088
        $region114: #{gps_node_forward.1} parent=103 // pred_check_branch
          %2091 = sbr.rel (%p2089) target = $region116
        $region115: #{gps_node_forward.1} parent=103 // pred_region
          %v2092 = vpack.c.bf16 %v2085, %v2084
          %v2093 = vld [vmem:[%s6] sm:$0xf]
          %v2094 = vld [vmem:[%s6 + $0x4] sm:$0xf]
          %v2095 = vld [vmem:[%s6 + $0x8] sm:$0xf]
          %v2096 = vld [vmem:[%s6 + $0xc] sm:$0xf]
          %v2097 = vld [vmem:[%s6 + $0x10] sm:$0xf]
          %v2098 = vld [vmem:[%s6 + $0x14] sm:$0xf]
          %v2099 = vld [vmem:[%s6 + $0x18] sm:$0xf]
          %v2100 = vld [vmem:[%s6 + $0x1c] sm:$0xf]
          %v2101 = vld [vmem:[%s7] sm:$0x1]
          %v2103 = vlaneseq
          %v2104 = vshrl.u32 %v2103, 7
          %v2105 = vsub.s32 0, %v2104
          %v2106 = vrot.slane %v2101, %v2105
          %v2116 = vunpack.c.l.b16 %v2093
          %v2117 = vunpack.c.l.b16 %v2094
          %v2118 = vunpack.c.l.b16 %v2095
          %v2119 = vunpack.c.l.b16 %v2096
          %v2120 = vunpack.c.l.b16 %v2097
          %v2121 = vunpack.c.l.b16 %v2098
          %v2122 = vunpack.c.l.b16 %v2099
          %v2123 = vunpack.c.l.b16 %v2100
          %v2124 = vpack.c.b16 %v2117, %v2116
          %v2125 = vpack.c.b16 %v2119, %v2118
          %v2126 = vpack.c.b16 %v2121, %v2120
          %v2127 = vpack.c.b16 %v2123, %v2122
          %v2133 = vsel %vm951, %v2092, 0
          %2135 = vmatprep.subr.bf16.mxu0 0
          %2136 = vmatpush1.bf16.msra.mxu0 %v2124
          %2137 = vmatprep.subr.bf16.mxu0 0
          %2138 = vmatpush1.bf16.msra.mxu0 %v2125
          %2139 = vmatprep.subr.bf16.mxu0 0
          %2140 = vmatpush1.bf16.msra.mxu0 %v2126
          %2141 = vmatprep.subr.bf16.mxu0 0
          %2142 = vmatpush1.bf16.msra.mxu0 %v2127
          %2143 = vmatprep.subr.bf16.mxu0 0
          %2144 = vmatpush1.bf16.msra.mxu0 0
          %2145 = vmatprep.subr.bf16.mxu0 0
          %2146 = vmatpush1.bf16.msra.mxu0 0
          %2147 = vmatprep.subr.bf16.mxu0 0
          %2148 = vmatpush1.bf16.msra.mxu0 0
          %2149 = vmatprep.subr.bf16.mxu0 0
          %2150 = vmatpush1.bf16.msra.mxu0 0
          %2151 = vmatprep.subr.bf16.mxu0 0
          %2152 = vmatpush1.bf16.msra.mxu0 0
          %2153 = vmatprep.subr.bf16.mxu0 0
          %2154 = vmatpush1.bf16.msra.mxu0 0
          %2155 = vmatprep.subr.bf16.mxu0 0
          %2156 = vmatpush1.bf16.msra.mxu0 0
          %2157 = vmatprep.subr.bf16.mxu0 0
          %2158 = vmatpush1.bf16.msra.mxu0 0
          %2159 = vmatprep.subr.bf16.mxu0 0
          %2160 = vmatpush1.bf16.msra.mxu0 0
          %2161 = vmatprep.subr.bf16.mxu0 0
          %2162 = vmatpush1.bf16.msra.mxu0 0
          %2163 = vmatprep.subr.bf16.mxu0 0
          %2164 = vmatpush1.bf16.msra.mxu0 0
          %2165 = vmatprep.subr.bf16.mxu0 0
          %2166 = vmatpush1.bf16.msra.mxu0 0
          %2167 = vmatprep.mubr.bf16.mxu0 0
          %2168 = vmatmul.mubr.bf16.gmra.mrb[0].mxu0 %v2133
          %v2169 = vpop.f32.mrb[0].mxu0
          %v2170 = vadd.f32 %v2106, %v2169
          %v2171 = vpop.f32.mrb[0].mxu0
          %v2172 = vpop.f32.mrb[0].mxu0
          %v2173 = vadd.f32 %v2106, %v2172
          %v2174 = vpop.f32.mrb[0].mxu0
          %2175 = vdwg.mxu0
          %2176 = vmax.xlane.f32.xlu0 %v2170
          %v2177 = vpop.xlane.xlu0 %2176
          %2178 = vmax.xlane.f32.xlu0 %v2173
          %v2179 = vpop.xlane.xlu0 %2178
          %v2180 = vsub.f32 %v2170, %v2177
          %v2181 = vsub.f32 %v2173, %v2179
          %v2182 = vmul.f32 %v2180, 1.442695
          %v2183 = vpow.pop %v2182
          %v2184 = vmul.f32 %v2181, 1.442695
          %v2185 = vpow.pop %v2184
          %2186 = vadd.xlane.f32.xlu0 %v2183
          %v2187 = vpop.xlane.xlu0 %2186
          %2188 = vadd.xlane.f32.xlu0 %v2185
          %v2189 = vpop.xlane.xlu0 %2188
          %v2190 = vlog2.pop %v2187
          %v2191 = vmul.f32 %v2190, 0.6931472
          %v2192 = vlog2.pop %v2189
          %v2193 = vmul.f32 %v2192, 0.6931472
          %v2194 = vadd.f32 %v2191, %v2177
          %v2195 = vadd.f32 %v2193, %v2179
          %v2196 = vsub.f32 %v2170, %v2194
          %v2197 = vsub.f32 %v2173, %v2195
          %2198 = vst [vmem:[%s21] sm:$0xff] %v2196
          %2199 = vst [vmem:[%s21 + $0x8] sm:$0xff] %v2197
        $region116: #{gps_node_forward.1} parent=103 // pred_fallthru
          _
        // Predicated region
        $region117: #{gps_node_forward.1} parent=103 // pred_check
          %p2200 = pneg %p552
        $region118: #{gps_node_forward.1} parent=103 // pred_check_branch
          %2202 = sbr.rel (%p2200) target = $region120
        $region119: #{gps_node_forward.1} parent=103 // pred_region
          _
        $region120: #{gps_node_forward.1} parent=103 // pred_fallthru
          _
        // Predicated region
        $region121: #{gps_node_forward.1} parent=103 // pred_check
          %p2203 = pneg %p552
        $region122: #{gps_node_forward.1} parent=103 // pred_check_branch
          %2205 = sbr.rel (%p2203) target = $region124
        $region123: #{gps_node_forward.1} parent=103 // pred_region
          _
        $region124: #{gps_node_forward.1} parent=103 // pred_fallthru
          _
      $region104: #{gps_node_forward.1} parent=5 // pred_fallthru
        _
      %p2206 = scmp.le.s32.totalorder 2, %s28
      // Predicated region
      $region125: #{gps_node_forward.1} parent=5 // pred_check
        %p2207 = pneg %p2206
      $region126: #{gps_node_forward.1} parent=5 // pred_check_branch
        %2209 = sbr.rel (%p2207) target = $region128
      $region127: #{gps_node_forward.1} parent=5 // pred_region
        %s2210 = ssub.s32 %s28, 2
      $region128: #{gps_node_forward.1} parent=5 // pred_fallthru
        _
    $region6: #{gps_node_forward.1} parent=1 // loop_footer
      %s32 = sadd.s32 1, %s28
    $region7: #{gps_node_forward.1} parent=1 // loop_footer_branch
      %27 = sbr.rel target = $region3
    $region8: #{gps_node_forward.1} parent=1 // loop_exit
      _
    %2211 = vsyncpa [#allocation5], 1
    %s2212 = scalar_lea.sflag [#allocation5], 1
    %2213 = vsyncpa %s2212, 1

</llo_original>
